<compile_context>
chip_gen: v6e
topology: v6e:2x2x1
jax: 0.10.0
libtpu: 0.0.40
codegen_flags: <defaults>
</compile_context>

<pallas_src>
import math
import functools

import jax
import jax.numpy as jnp
from jax.experimental import pallas as pl
from jax.experimental.pallas import tpu as pltpu


# --------------------------------------------------------------------------- #
# generation-aware tiling helpers / VMEM budget
# --------------------------------------------------------------------------- #

def _query_vmem_bytes(default=64 * 1024 * 1024):
    try:
        return int(pltpu.get_tpu_info().vmem_capacity_bytes)
    except Exception:
        return default


_VMEM_BYTES = _query_vmem_bytes()
_BIG_VMEM = _VMEM_BYTES >= 96 * 1024 * 1024          # v5e/v6e (128 MiB) vs v7x (64 MiB)
_VMEM_LIMIT = min(int(_VMEM_BYTES * 3 // 4), 96 * 1024 * 1024)

_ROW_CAP = 256                                        # sublane (row) tiles
_LANE_CAP = 512 if _BIG_VMEM else 256                 # output lane tiles
_SEQ_CAP = 256 if _BIG_VMEM else 128                  # attention q/kv tiles


def _pick_tile(dim, cap, align):
    """Largest tile <= cap that divides `dim` and is a multiple of `align`.
    Full dim is always legal when dim <= cap; returns None if nothing works."""
    if dim <= cap:
        return dim
    t = (cap // align) * align
    while t >= align:
        if dim % t == 0:
            return t
        t -= align
    return None


def _row_tile(m):
    t = _pick_tile(m, _ROW_CAP, 8)
    if t is None:
        raise ValueError(f"row dim {m} has no 8-aligned tile <= {_ROW_CAP}; pad it")
    return t


def _lane_tile(n):
    t = _pick_tile(n, _LANE_CAP, 128)
    if t is None:
        raise ValueError(f"lane dim {n} has no 128-aligned tile <= {_LANE_CAP}; pad it")
    return t


def _seq_tile(s):
    # kv tile is the lane dim of the score matrix -> prefer 128-aligned tiles.
    t = _pick_tile(s, _SEQ_CAP, 128)
    if t is None:
        t = _pick_tile(s, _SEQ_CAP, 8)
    if t is None:
        raise ValueError(f"sequence length {s} has no 8-aligned tile <= {_SEQ_CAP}; pad it")
    return t


def _cost(flops, bytes_accessed, transcendentals=0):
    return pl.CostEstimate(flops=int(flops), transcendentals=int(transcendentals),
                           bytes_accessed=int(bytes_accessed))


# --------------------------------------------------------------------------- #
# kernel 1: fused RMSNorm + per-head QKV projection (+bias)  out: (3,H,M,dk) bf16
# --------------------------------------------------------------------------- #

def _qkv_kernel(x_ref, nw_ref, w_ref, b_ref, o_ref, h_scr, *, eps):
    c = pl.program_id(1)
    h = pl.program_id(2)

    # RMSNorm prologue hoisted: computed once per row tile, reused for all
    # 3 * H (component, head) steps via the persistent VMEM scratch.
    @pl.when((c == 0) & (h == 0))
    def _norm():
        x = x_ref[...]                                            # (tm, D) f32
        inv_rms = jax.lax.rsqrt(jnp.mean(x * x, axis=-1, keepdims=True) + eps)
        h_scr[...] = (x * inv_rms * nw_ref[...]).astype(h_scr.dtype)

    acc = jnp.dot(h_scr[...], w_ref[0, 0],                        # (tm, dk) f32
                  preferred_element_type=jnp.float32)
    o_ref[0, 0] = (acc + b_ref[0, 0]).astype(o_ref.dtype)         # bf16 store


def qkv_projection(x2d, norm_w, wqkv_h, bqkv_h, *, eps=1e-6):
    """x2d: (M, D) f32; wqkv_h: (3, H, D, dk) bf16; bqkv_h: (3, H, 1, dk) f32.
    Returns (3, H, M, dk) bf16 (per-head layout, no HBM transpose needed)."""
    M, D = x2d.shape
    _, H, _, dk = wqkv_h.shape
    tm = _row_tile(M)
    grid = (M // tm, 3, H)
    return pl.pallas_call(
        functools.partial(_qkv_kernel, eps=eps),
        grid=grid,
        in_specs=[
            pl.BlockSpec((tm, D), lambda i, c, h: (i, 0)),
            pl.BlockSpec((1, D), lambda i, c, h: (0, 0)),
            pl.BlockSpec((1, 1, D, dk), lambda i, c, h: (c, h, 0, 0)),
            pl.BlockSpec((1, 1, 1, dk), lambda i, c, h: (c, h, 0, 0)),
        ],
        out_specs=pl.BlockSpec((1, 1, tm, dk), lambda i, c, h: (c, h, i, 0)),
        out_shape=jax.ShapeDtypeStruct((3, H, M, dk), jnp.bfloat16),
        scratch_shapes=[pltpu.VMEM((tm, D), jnp.bfloat16)],       # normalized rows
        compiler_params=pltpu.CompilerParams(
            dimension_semantics=("parallel", "arbitrary", "arbitrary"),
            vmem_limit_bytes=_VMEM_LIMIT),
        cost_estimate=_cost(flops=6 * M * D * D,
                            bytes_accessed=M * D * 4 + 3 * D * D * 2 + 3 * M * D * 2,
                            transcendentals=M),
    )(x2d, norm_w.reshape(1, D), wqkv_h, bqkv_h)


# --------------------------------------------------------------------------- #
# kernel 2: flash attention with in-kernel RoPE (causal); grid = (B, H, Sq, Skv)
# --------------------------------------------------------------------------- #

def _attn_kernel(q_ref, k_ref, v_ref, cq_ref, sq_ref, ck_ref, sk_ref,
                 o_ref, m_scr, l_scr, acc_scr, *, scale, causal):
    qi = pl.program_id(2)
    ki = pl.program_id(3)
    nk = pl.num_programs(3)
    tq = q_ref.shape[3]
    tk = k_ref.shape[3]
    dk = q_ref.shape[4]
    half = dk // 2

    @pl.when(ki == 0)
    def _init():
        m_scr[...] = jnp.full_like(m_scr, -jnp.inf)
        l_scr[...] = jnp.zeros_like(l_scr)
        acc_scr[...] = jnp.zeros_like(acc_scr)

    def rope(t, cos, sin_signed):
        # rotate_half's sign is folded into the host-side sin table; the
        # rotation itself is an XLU roll when the lane width allows it.
        if half % 128 == 0:
            rot = pltpu.roll(t, shift=half, axis=-1)
        else:
            rot = jnp.concatenate([t[:, half:], t[:, :half]], axis=-1)
        return t * cos + rot * sin_signed                         # f32 math

    def update(apply_mask):
        q = rope(q_ref[0, 0, 0], cq_ref[...], sq_ref[...]) * scale  # (tq, dk) f32
        k = rope(k_ref[0, 0, 0], ck_ref[...], sk_ref[...])          # (tk, dk) f32
        v = v_ref[0, 0, 0]                                          # (tk, dk) bf16

        s = jax.lax.dot_general(                                    # (tq, tk) f32
            q.astype(jnp.bfloat16), k.astype(jnp.bfloat16),
            (((1,), (1,)), ((), ())),
            preferred_element_type=jnp.float32)

        if apply_mask:   # only diagonal tiles pay the iota/compare/select
            row = qi * tq + jax.lax.broadcasted_iota(jnp.int32, (tq, tk), 0)
            col = ki * tk + jax.lax.broadcasted_iota(jnp.int32, (tq, tk), 1)
            s = jnp.where(col <= row, s, jnp.float32(-1e9))

        # online softmax (f32 statistics)
        m_prev = m_scr[...]
        m_new = jnp.maximum(m_prev, jnp.max(s, axis=-1, keepdims=True))
        alpha = jnp.exp(m_prev - m_new)
        p = jnp.exp(s - m_new)
        l_scr[...] = alpha * l_scr[...] + jnp.sum(p, axis=-1, keepdims=True)
        acc_scr[...] = alpha * acc_scr[...] + jnp.dot(
            p.astype(jnp.bfloat16), v, preferred_element_type=jnp.float32)
        m_scr[...] = m_new

    if causal:
        # requires tq == tk (asserted in the wrapper): ki == qi is the only
        # partially-masked tile; ki < qi is fully unmasked; ki > qi is skipped.
        pl.when(ki == qi)(lambda: update(True))
        pl.when(ki < qi)(lambda: update(False))
    else:
        update(False)

    @pl.when(ki == nk - 1)
    def _finalize():
        inv = pl.reciprocal(l_scr[...], approx=True)   # EUP; ~2^-12 rel. error
        o_ref[0, 0] = (acc_scr[...] * inv).astype(o_ref.dtype)


def flash_attention(qkv, cos, sin_signed, *, causal=True):
    """qkv: (3, H, B, S, dk) bf16; cos/sin_signed: (S, dk) f32 -> (H, B, S, dk) bf16."""
    _, H, B, S, dk = qkv.shape
    tq = _seq_tile(S)
    tk = tq
    assert tq == tk, "online-softmax / diagonal-tile logic requires tq == tk"
    grid = (B, H, S // tq, S // tk)

    q_spec = pl.BlockSpec((1, 1, 1, tq, dk), lambda b, h, qi, ki: (0, h, b, qi, 0))
    k_spec = pl.BlockSpec((1, 1, 1, tk, dk), lambda b, h, qi, ki: (1, h, b, ki, 0))
    v_spec = pl.BlockSpec((1, 1, 1, tk, dk), lambda b, h, qi, ki: (2, h, b, ki, 0))
    cq_spec = pl.BlockSpec((tq, dk), lambda b, h, qi, ki: (qi, 0))
    ck_spec = pl.BlockSpec((tk, dk), lambda b, h, qi, ki: (ki, 0))
    o_spec = pl.BlockSpec((1, 1, tq, dk), lambda b, h, qi, ki: (h, b, qi, 0))

    return pl.pallas_call(
        functools.partial(_attn_kernel, scale=1.0 / math.sqrt(dk), causal=causal),
        grid=grid,
        in_specs=[q_spec, k_spec, v_spec, cq_spec, cq_spec, ck_spec, ck_spec],
        out_specs=o_spec,
        out_shape=jax.ShapeDtypeStruct((H, B, S, dk), jnp.bfloat16),
        scratch_shapes=[
            pltpu.VMEM((tq, 1), jnp.float32),    # running max
            pltpu.VMEM((tq, 1), jnp.float32),    # running sum
            pltpu.VMEM((tq, dk), jnp.float32),   # output accumulator
        ],
        compiler_params=pltpu.CompilerParams(
            dimension_semantics=("parallel", "parallel", "parallel", "arbitrary"),
            vmem_limit_bytes=_VMEM_LIMIT),
        cost_estimate=_cost(flops=4 * B * H * S * S * dk,
                            bytes_accessed=(3 * B * H * S * dk * 2 * (S // tk)
                                            + B * H * S * dk * 2),
                            transcendentals=B * H * S * S),
    )(qkv, qkv, qkv, cos, sin_signed, cos, sin_signed)


# --------------------------------------------------------------------------- #
# kernel 3: output projection with fused head-recombination + bias + residual
# --------------------------------------------------------------------------- #

def _out_proj_kernel(a_ref, w_ref, b_ref, r_ref, o_ref):
    h = pl.program_id(2)

    @pl.when(h == 0)
    def _init():
        o_ref[...] = r_ref[...] + b_ref[...]          # residual + bias, f32

    # sum_h attn[h] @ Wo[h*dk:(h+1)*dk, :], accumulated in the resident o_ref.
    o_ref[...] += jnp.dot(a_ref[0], w_ref[0], preferred_element_type=jnp.float32)


def out_projection_residual(attn_h, wo_h, bo, res2d):
    """attn_h: (H, M, dk) bf16; wo_h: (H, dk, D) bf16; bo: (D,); res2d: (M, D) f32."""
    H, M, dk = attn_h.shape
    D = wo_h.shape[2]
    tm, tn = _row_tile(M), _lane_tile(D)
    grid = (M // tm, D // tn, H)
    return pl.pallas_call(
        _out_proj_kernel,
        grid=grid,
        in_specs=[
            pl.BlockSpec((1, tm, dk), lambda i, j, h: (h, i, 0)),
            pl.BlockSpec((1, dk, tn), lambda i, j, h: (h, 0, j)),
            pl.BlockSpec((1, tn), lambda i, j, h: (0, j)),
            pl.BlockSpec((tm, tn), lambda i, j, h: (i, j)),
        ],
        out_specs=pl.BlockSpec((tm, tn), lambda i, j, h: (i, j)),
        out_shape=jax.ShapeDtypeStruct((M, D), jnp.float32),
        compiler_params=pltpu.CompilerParams(
            dimension_semantics=("parallel", "parallel", "arbitrary"),
            vmem_limit_bytes=_VMEM_LIMIT),
        cost_estimate=_cost(flops=2 * M * D * D,
                            bytes_accessed=(H * M * dk * 2 + D * D * 2 * (M // tm)
                                            + 2 * M * D * 4),
                            transcendentals=0),
    )(attn_h, wo_h, bo.reshape(1, D), res2d)


# --------------------------------------------------------------------------- #
# kernel 4: fused RMSNorm + SwiGLU FFN + residual (d_ff reduction tiled,
#           accumulation directly into the resident f32 output block)
# --------------------------------------------------------------------------- #

def _ffn_kernel(x_ref, nw_ref, wg_ref, wu_ref, wd_ref, o_ref, h_scr, *, eps):
    f = pl.program_id(1)

    @pl.when(f == 0)
    def _init():
        x = x_ref[...]                                            # (tm, D) f32
        inv_rms = jax.lax.rsqrt(jnp.mean(x * x, axis=-1, keepdims=True) + eps)
        h_scr[...] = (x * inv_rms * nw_ref[...]).astype(h_scr.dtype)
        o_ref[...] = x                                            # residual init

    h = h_scr[...]                                                # (tm, D) bf16
    g = jnp.dot(h, wg_ref[...], preferred_element_type=jnp.float32)   # gate (x1)
    u = jnp.dot(h, wu_ref[...], preferred_element_type=jnp.float32)   # up   (x2)
    act = g * (u * jax.nn.sigmoid(u))                              # x1 * silu(x2)
    o_ref[...] += jnp.dot(act.astype(jnp.bfloat16), wd_ref[...],
                          preferred_element_type=jnp.float32)


def ffn_fused(x2d, norm_w, w_gate, w_up, w_down, *, eps=1e-6):
    """x2d + W_down @ SwiGLU(W_gate/W_up @ RMSNorm(x2d)); weights bf16."""
    M, D = x2d.shape
    F = w_gate.shape[1]
    tm, tf = _row_tile(M), _lane_tile(F)
    grid = (M // tm, F // tf)
    # TODO(synk): on v5e, if weight DMA is exposed, add pipeline_mode=pl.Buffered(3)
    # to the three weight BlockSpecs (trade VMEM for deeper buffering).
    return pl.pallas_call(
        functools.partial(_ffn_kernel, eps=eps),
        grid=grid,
        in_specs=[
            pl.BlockSpec((tm, D), lambda i, f: (i, 0)),
            pl.BlockSpec((1, D), lambda i, f: (0, 0)),
            pl.BlockSpec((D, tf), lambda i, f: (0, f)),
            pl.BlockSpec((D, tf), lambda i, f: (0, f)),
            pl.BlockSpec((tf, D), lambda i, f: (f, 0)),
        ],
        out_specs=pl.BlockSpec((tm, D), lambda i, f: (i, 0)),
        out_shape=jax.ShapeDtypeStruct((M, D), jnp.float32),
        scratch_shapes=[pltpu.VMEM((tm, D), jnp.bfloat16)],       # normalized rows
        compiler_params=pltpu.CompilerParams(
            dimension_semantics=("parallel", "arbitrary"),
            vmem_limit_bytes=_VMEM_LIMIT),
        cost_estimate=_cost(flops=6 * M * D * F,
                            bytes_accessed=2 * M * D * 4 + 3 * D * F * 2 * (M // tm),
                            transcendentals=M * F + M),
    )(x2d, norm_w.reshape(1, D), w_gate, w_up, w_down)


# --------------------------------------------------------------------------- #
# decoder block (glue only; all heavy math in Pallas, reshapes are layout-free)
# --------------------------------------------------------------------------- #

def build_rope(d_k, seq_len):
    inv_freq = 1.0 / (10000.0 ** (jnp.arange(0, d_k, 2, dtype=jnp.float32) / d_k))
    t = jnp.arange(seq_len, dtype=jnp.float32)
    freqs = jnp.einsum("i,j->ij", t, inv_freq)
    emb = jnp.concatenate([freqs, freqs], axis=-1)                # (S, d_k)
    return jnp.cos(emb), jnp.sin(emb)


def decoder_block(x, params, *, heads, causal=True, eps=1e-6):
    B, S, D = x.shape
    dk = D // heads
    assert dk % 2 == 0
    M = B * S
    x2d = x.reshape(M, D)

    # sublayer 0: RMSNorm -> fused per-head QKV -> RoPE + causal flash attention
    #             -> output projection (+head recombination, +bias, +residual).
    qkv = qkv_projection(x2d, params["norm1_w"], params["wqkv_h"], params["bqkv_h"],
                         eps=eps)                                  # (3,H,M,dk) bf16
    qkv = qkv.reshape(3, heads, B, S, dk)                          # free reshape

    cos, sin = build_rope(dk, S)
    half = dk // 2
    sin_signed = jnp.concatenate([-sin[:, :half], sin[:, half:]], axis=-1)

    attn = flash_attention(qkv, cos, sin_signed, causal=causal)   # (H,B,S,dk) bf16
    attn = attn.reshape(heads, M, dk)                              # free reshape
    x2d = out_projection_residual(attn, params["wo_h"], params["bo"], x2d)

    # sublayer 1: RMSNorm -> SwiGLU FFN -> residual, single fused kernel.
    x2d = ffn_fused(x2d, params["norm2_w"], params["w_gate"], params["w_up"],
                    params["w_down"], eps=eps)
    return x2d.reshape(B, S, D)


# --------------------------------------------------------------------------- #
# parameter init (matmul weights bf16 in per-head kernel layouts; biases /
# norm scales f32)
# --------------------------------------------------------------------------- #

def init_params(key, d_model, d_ff, heads):
    D, H = d_model, heads
    dk = D // H
    ks = jax.random.split(key, 9)
    s = 0.02

    def w(k, shape):
        return (jax.random.normal(k, shape, jnp.float32) * s).astype(jnp.bfloat16)

    def b(k, shape):
        return jax.random.normal(k, shape, jnp.float32) * s

    wq, wk, wv = (w(ks[i], (D, D)) for i in range(3))
    bq, bk, bv = (b(ks[3 + i], (D,)) for i in range(3))
    wqkv = jnp.stack([wq, wk, wv], axis=0)                         # (3, D, D)
    bqkv = jnp.stack([bq, bk, bv], axis=0)                         # (3, D)
    wo = w(ks[6], (D, D))
    return {
        "norm1_w": jnp.ones((D,), jnp.float32),
        # one-time weight re-layouts so every kernel reads/writes per-head slices
        "wqkv_h": wqkv.reshape(3, D, H, dk).transpose(0, 2, 1, 3),  # (3, H, D, dk)
        "bqkv_h": bqkv.reshape(3, H, 1, dk),                        # (3, H, 1, dk)
        "wo_h": wo.reshape(H, dk, D),                               # (H, dk, D)
        "bo": b(ks[7], (D,)),
        "norm2_w": jnp.ones((D,), jnp.float32),
        "w_gate": w(ks[8], (D, d_ff)),                              # SwiGLU x1
        "w_up": w(jax.random.fold_in(ks[8], 1), (D, d_ff)),         # SwiGLU x2
        "w_down": w(jax.random.fold_in(ks[8], 2), (d_ff, D)),
    }


# --------------------------------------------------------------------------- #
# plain-JAX reference (f32) for a correctness sanity check
# --------------------------------------------------------------------------- #

def decoder_block_ref(x, p, *, heads, causal=True, eps=1e-6):
    B, S, D = x.shape
    dk = D // heads

    wqkv = p["wqkv_h"].astype(jnp.float32).transpose(0, 2, 1, 3).reshape(3, D, D)
    bqkv = p["bqkv_h"].astype(jnp.float32).reshape(3, D)
    wo = p["wo_h"].astype(jnp.float32).reshape(D, D)

    def rmsnorm(t, w):
        rms = jnp.sqrt(jnp.mean(t * t, axis=-1, keepdims=True) + eps)
        return t / rms * w

    def rot_half(t):
        return jnp.concatenate([-t[..., dk // 2:], t[..., :dk // 2]], axis=-1)

    cos, sin = build_rope(dk, S)

    h = rmsnorm(x, p["norm1_w"])
    q = h @ wqkv[0] + bqkv[0]
    k = h @ wqkv[1] + bqkv[1]
    v = h @ wqkv[2] + bqkv[2]

    def split(t):
        return t.reshape(B, S, heads, dk).transpose(0, 2, 1, 3)

    q, k, v = split(q), split(k), split(v)
    q = q * cos + rot_half(q) * sin
    k = k * cos + rot_half(k) * sin
    s = jnp.einsum("bhqd,bhkd->bhqk", q, k) / math.sqrt(dk)
    if causal:
        row = jnp.arange(S)[:, None]
        col = jnp.arange(S)[None, :]
        s = jnp.where(col <= row, s, -1e9)
    pmat = jax.nn.softmax(s, axis=-1)
    o = jnp.einsum("bhqk,bhkd->bhqd", pmat, v)
    o = o.transpose(0, 2, 1, 3).reshape(B, S, D)
    x = x + o @ wo + p["bo"]

    h = rmsnorm(x, p["norm2_w"])
    g = h @ p["w_gate"].astype(jnp.float32)
    u = h @ p["w_up"].astype(jnp.float32)
    x = x + (g * jax.nn.silu(u)) @ p["w_down"].astype(jnp.float32)
    return x


# --------------------------------------------------------------------------- #
# main
# --------------------------------------------------------------------------- #

if __name__ == "__main__":
    d_model, heads, d_ff = 32, 4, 64
    batch, seq = 2, 8

    key = jax.random.PRNGKey(0)
    pkey, xkey = jax.random.split(key)
    params = init_params(pkey, d_model, d_ff, heads)
    x = jax.random.normal(xkey, (batch, seq, d_model), jnp.float32)

    fwd = jax.jit(functools.partial(decoder_block, heads=heads, causal=True))
    y = fwd(x, params)
    jax.block_until_ready(y)

    assert y.shape == (batch, seq, d_model), y.shape
    assert bool(jnp.all(jnp.isfinite(y)))

    y_ref = decoder_block_ref(x, params, heads=heads, causal=True)
    max_err = float(jnp.max(jnp.abs(y - y_ref)))
    assert max_err < 2e-2, f"max abs error vs reference: {max_err}"

    print("KERNEL_OK")
</pallas_src>

<mosaic_0001>
module attributes {stable_mosaic.version = 11 : i64} {
  func.func @_qkv_kernel(%arg0: i32, %arg1: i32, %arg2: i32, %arg3: memref<16x32xf32, #tpu.memory_space<vmem>>, %arg4: memref<1x32xf32, #tpu.memory_space<vmem>>, %arg5: memref<1x1x32x8xbf16, #tpu.memory_space<vmem>>, %arg6: memref<1x1x1x8xf32, #tpu.memory_space<vmem>>, %arg7: memref<1x1x16x8xbf16, #tpu.memory_space<vmem>>, %arg8: memref<16x32xbf16, #tpu.memory_space<vmem>>) attributes {dimension_semantics = [#tpu.dimension_semantics<parallel>, #tpu.dimension_semantics<arbitrary>, #tpu.dimension_semantics<arbitrary>], iteration_bounds = array<i64: 1, 3, 4>, scalar_prefetch = 0 : i64, scratch_operands = 1 : i64, tpu.core_type = #tpu.core_type<tc>, window_params = [{transform_indices = @transform_0, window_bounds = array<i64: 16, 32>}, {pipeline_mode = #tpu.pipeline_mode<synchronous>, transform_indices = @transform_1, window_bounds = array<i64: 1, 32>}, {transform_indices = @transform_2, window_bounds = array<i64: 1, 1, 32, 8>}, {transform_indices = @transform_3, window_bounds = array<i64: 1, 1, 1, 8>}, {transform_indices = @transform_4, window_bounds = array<i64: 1, 1, 16, 8>}]} {
    %c0_i32 = arith.constant 0 : i32
    %0 = arith.cmpi eq, %arg1, %c0_i32 : i32
    %c0_i32_0 = arith.constant 0 : i32
    %1 = arith.cmpi eq, %arg2, %c0_i32_0 : i32
    %2 = arith.andi %0, %1 : i1
    %3 = arith.extui %2 : i1 to i32
    %c0_i32_1 = arith.constant 0 : i32
    %4 = arith.cmpi ne, %3, %c0_i32_1 : i32
    scf.if %4 {
      %c0_15 = arith.constant 0 : index
      %c0_16 = arith.constant 0 : index
      %17 = vector.load %arg3[%c0_15, %c0_16] : memref<16x32xf32, #tpu.memory_space<vmem>>, vector<16x32xf32>
      %18 = arith.mulf %17, %17 : vector<16x32xf32>
      %cst_17 = arith.constant dense<0.000000e+00> : vector<16xf32>
      %19 = vector.multi_reduction <add>, %18, %cst_17 [1] : vector<16x32xf32> to vector<16xf32>
      %20 = vector.shape_cast %19 : vector<16xf32> to vector<16x1xf32>
      %cst_18 = arith.constant 3.200000e+01 : f32
      %21 = vector.broadcast %cst_18 : f32 to vector<16x1xf32>
      %22 = arith.divf %20, %21 : vector<16x1xf32>
      %cst_19 = arith.constant 9.99999997E-7 : f32
      %23 = vector.broadcast %cst_19 : f32 to vector<16x1xf32>
      %24 = arith.addf %22, %23 : vector<16x1xf32>
      %25 = math.rsqrt %24 : vector<16x1xf32>
      %26 = vector.broadcast %25 : vector<16x1xf32> to vector<16x32xf32>
      %27 = arith.mulf %17, %26 : vector<16x32xf32>
      %c0_20 = arith.constant 0 : index
      %c0_21 = arith.constant 0 : index
      %28 = vector.load %arg4[%c0_20, %c0_21] : memref<1x32xf32, #tpu.memory_space<vmem>>, vector<1x32xf32>
      %29 = vector.broadcast %28 : vector<1x32xf32> to vector<16x32xf32>
      %30 = arith.mulf %27, %29 : vector<16x32xf32>
      %31 = arith.truncf %30 : vector<16x32xf32> to vector<16x32xbf16>
      %c0_22 = arith.constant 0 : index
      %c0_23 = arith.constant 0 : index
      %32 = vector.load %arg8[%c0_22, %c0_23] : memref<16x32xbf16, #tpu.memory_space<vmem>>, vector<16x32xbf16>
      tpu.vector_store %arg8[%c0_22, %c0_23], %31 {strides = array<i32>} : memref<16x32xbf16, #tpu.memory_space<vmem>>, vector<16x32xbf16>,
    } else {
    }
    %c0 = arith.constant 0 : index
    %c0_2 = arith.constant 0 : index
    %5 = vector.load %arg8[%c0, %c0_2] : memref<16x32xbf16, #tpu.memory_space<vmem>>, vector<16x32xbf16>
    %c0_3 = arith.constant 0 : index
    %c0_4 = arith.constant 0 : index
    %c0_5 = arith.constant 0 : index
    %c0_6 = arith.constant 0 : index
    %6 = vector.load %arg5[%c0_3, %c0_4, %c0_5, %c0_6] : memref<1x1x32x8xbf16, #tpu.memory_space<vmem>>, vector<1x1x32x8xbf16>
    %7 = vector.shape_cast %6 : vector<1x1x32x8xbf16> to vector<32x8xbf16>
    %cst = arith.constant dense<0.000000e+00> : vector<16x8xf32>
    %8 = tpu.matmul %5, %7, %cst {dimension_numbers = #tpu.dot_dimension_numbers<[1], [0], [0], [1], [0, 0, 1, 1], [], []>} : vector<16x32xbf16>, vector<32x8xbf16>, vector<16x8xf32> -> vector<16x8xf32>
    %c0_7 = arith.constant 0 : index
    %c0_8 = arith.constant 0 : index
    %c0_9 = arith.constant 0 : index
    %c0_10 = arith.constant 0 : index
    %9 = vector.load %arg6[%c0_7, %c0_8, %c0_9, %c0_10] : memref<1x1x1x8xf32, #tpu.memory_space<vmem>>, vector<1x1x1x8xf32>
    %10 = vector.shape_cast %9 : vector<1x1x1x8xf32> to vector<1x8xf32>
    %11 = vector.broadcast %10 : vector<1x8xf32> to vector<16x8xf32>
    %12 = arith.addf %8, %11 : vector<16x8xf32>
    %13 = arith.truncf %12 : vector<16x8xf32> to vector<16x8xbf16>
    %c0_11 = arith.constant 0 : index
    %c0_12 = arith.constant 0 : index
    %c0_13 = arith.constant 0 : index
    %c0_14 = arith.constant 0 : index
    %14 = vector.load %arg7[%c0_11, %c0_12, %c0_13, %c0_14] : memref<1x1x16x8xbf16, #tpu.memory_space<vmem>>, vector<1x1x16x8xbf16>
    %15 = vector.shape_cast %14 : vector<1x1x16x8xbf16> to vector<16x8xbf16>
    %16 = vector.shape_cast %13 : vector<16x8xbf16> to vector<1x1x16x8xbf16>
    tpu.vector_store %arg7[%c0_11, %c0_12, %c0_13, %c0_14], %16 {strides = array<i32>} : memref<1x1x16x8xbf16, #tpu.memory_space<vmem>>, vector<1x1x16x8xbf16>,
    return
  }
  func.func @transform_0(%arg0: i32, %arg1: i32, %arg2: i32) -> (i32, i32) {
    %c0_i32 = arith.constant 0 : i32
    %c0_i32_0 = arith.constant 0 : i32
    return %arg0, %c0_i32 : i32, i32
  }
  func.func @transform_1(%arg0: i32, %arg1: i32, %arg2: i32) -> (i32, i32) {
    %c0_i32 = arith.constant 0 : i32
    %c0_i32_0 = arith.constant 0 : i32
    %c0_i32_1 = arith.constant 0 : i32
    return %c0_i32, %c0_i32_0 : i32, i32
  }
  func.func @transform_2(%arg0: i32, %arg1: i32, %arg2: i32) -> (i32, i32, i32, i32) {
    %c0_i32 = arith.constant 0 : i32
    %c0_i32_0 = arith.constant 0 : i32
    %c0_i32_1 = arith.constant 0 : i32
    return %arg1, %arg2, %c0_i32, %c0_i32_0 : i32, i32, i32, i32
  }
  func.func @transform_3(%arg0: i32, %arg1: i32, %arg2: i32) -> (i32, i32, i32, i32) {
    %c0_i32 = arith.constant 0 : i32
    %c0_i32_0 = arith.constant 0 : i32
    %c0_i32_1 = arith.constant 0 : i32
    return %arg1, %arg2, %c0_i32, %c0_i32_0 : i32, i32, i32, i32
  }
  func.func @transform_4(%arg0: i32, %arg1: i32, %arg2: i32) -> (i32, i32, i32, i32) {
    %c0_i32 = arith.constant 0 : i32
    %c0_i32_0 = arith.constant 0 : i32
    return %arg1, %arg2, %arg0, %c0_i32 : i32, i32, i32, i32
  }
}

module attributes {stable_mosaic.version = 11 : i64} {
  func.func @_attn_kernel(%arg0: i32, %arg1: i32, %arg2: i32, %arg3: i32, %arg4: memref<1x1x1x8x8xbf16, #tpu.memory_space<vmem>>, %arg5: memref<1x1x1x8x8xbf16, #tpu.memory_space<vmem>>, %arg6: memref<1x1x1x8x8xbf16, #tpu.memory_space<vmem>>, %arg7: memref<8x8xf32, #tpu.memory_space<vmem>>, %arg8: memref<8x8xf32, #tpu.memory_space<vmem>>, %arg9: memref<8x8xf32, #tpu.memory_space<vmem>>, %arg10: memref<8x8xf32, #tpu.memory_space<vmem>>, %arg11: memref<1x1x8x8xbf16, #tpu.memory_space<vmem>>, %arg12: memref<8x1xf32, #tpu.memory_space<vmem>>, %arg13: memref<8x1xf32, #tpu.memory_space<vmem>>, %arg14: memref<8x8xf32, #tpu.memory_space<vmem>>) attributes {dimension_semantics = [#tpu.dimension_semantics<parallel>, #tpu.dimension_semantics<parallel>, #tpu.dimension_semantics<parallel>, #tpu.dimension_semantics<arbitrary>], iteration_bounds = array<i64: 2, 4, 1, 1>, scalar_prefetch = 0 : i64, scratch_operands = 3 : i64, tpu.core_type = #tpu.core_type<tc>, window_params = [{transform_indices = @transform_0, window_bounds = array<i64: 1, 1, 1, 8, 8>}, {transform_indices = @transform_1, window_bounds = array<i64: 1, 1, 1, 8, 8>}, {transform_indices = @transform_2, window_bounds = array<i64: 1, 1, 1, 8, 8>}, {transform_indices = @transform_3, window_bounds = array<i64: 8, 8>}, {transform_indices = @transform_4, window_bounds = array<i64: 8, 8>}, {transform_indices = @transform_5, window_bounds = array<i64: 8, 8>}, {transform_indices = @transform_6, window_bounds = array<i64: 8, 8>}, {transform_indices = @transform_7, window_bounds = array<i64: 1, 1, 8, 8>}]} {
    %c0_i32 = arith.constant 0 : i32
    %0 = arith.cmpi eq, %arg3, %c0_i32 : i32
    %1 = arith.extui %0 : i1 to i32
    %c0_i32_0 = arith.constant 0 : i32
    %2 = arith.cmpi ne, %1, %c0_i32_0 : i32
    scf.if %2 {
      %cst = arith.constant 0xFF800000 : f32
      %12 = vector.broadcast %cst : f32 to vector<8x1xf32>
      %c0 = arith.constant 0 : index
      %c0_5 = arith.constant 0 : index
      %13 = vector.load %arg12[%c0, %c0_5] : memref<8x1xf32, #tpu.memory_space<vmem>>, vector<8x1xf32>
      tpu.vector_store %arg12[%c0, %c0_5], %12 {strides = array<i32>} : memref<8x1xf32, #tpu.memory_space<vmem>>, vector<8x1xf32>,
      %cst_6 = arith.constant 0.000000e+00 : f32
      %14 = vector.broadcast %cst_6 : f32 to vector<8x1xf32>
      %c0_7 = arith.constant 0 : index
      %c0_8 = arith.constant 0 : index
      %15 = vector.load %arg13[%c0_7, %c0_8] : memref<8x1xf32, #tpu.memory_space<vmem>>, vector<8x1xf32>
      tpu.vector_store %arg13[%c0_7, %c0_8], %14 {strides = array<i32>} : memref<8x1xf32, #tpu.memory_space<vmem>>, vector<8x1xf32>,
      %cst_9 = arith.constant 0.000000e+00 : f32
      %16 = vector.broadcast %cst_9 : f32 to vector<8x8xf32>
      %c0_10 = arith.constant 0 : index
      %c0_11 = arith.constant 0 : index
      %17 = vector.load %arg14[%c0_10, %c0_11] : memref<8x8xf32, #tpu.memory_space<vmem>>, vector<8x8xf32>
      tpu.vector_store %arg14[%c0_10, %c0_11], %16 {strides = array<i32>} : memref<8x8xf32, #tpu.memory_space<vmem>>, vector<8x8xf32>,
    } else {
    }
    %3 = arith.cmpi eq, %arg3, %arg2 : i32
    %4 = arith.extui %3 : i1 to i32
    %c0_i32_1 = arith.constant 0 : i32
    %5 = arith.cmpi ne, %4, %c0_i32_1 : i32
    scf.if %5 {
      %c0 = arith.constant 0 : index
      %c0_5 = arith.constant 0 : index
      %c0_6 = arith.constant 0 : index
      %c0_7 = arith.constant 0 : index
      %c0_8 = arith.constant 0 : index
      %12 = vector.load %arg4[%c0, %c0_5, %c0_6, %c0_7, %c0_8] : memref<1x1x1x8x8xbf16, #tpu.memory_space<vmem>>, vector<1x1x1x8x8xbf16>
      %13 = vector.shape_cast %12 : vector<1x1x1x8x8xbf16> to vector<8x8xbf16>
      %c0_9 = arith.constant 0 : index
      %c0_10 = arith.constant 0 : index
      %14 = vector.load %arg7[%c0_9, %c0_10] : memref<8x8xf32, #tpu.memory_space<vmem>>, vector<8x8xf32>
      %c0_11 = arith.constant 0 : index
      %c0_12 = arith.constant 0 : index
      %15 = vector.load %arg8[%c0_11, %c0_12] : memref<8x8xf32, #tpu.memory_space<vmem>>, vector<8x8xf32>
      %16 = vector.extract_strided_slice %13 {offsets = [0, 4], sizes = [8, 4], strides = [1, 1]} : vector<8x8xbf16> to vector<8x4xbf16>
      %17 = vector.extract_strided_slice %13 {offsets = [0, 0], sizes = [8, 4], strides = [1, 1]} : vector<8x8xbf16> to vector<8x4xbf16>
      %18 = tpu.concatenate %16, %17 in 1 : vector<8x4xbf16>, vector<8x4xbf16> -> vector<8x8xbf16>
      %19 = arith.extf %13 : vector<8x8xbf16> to vector<8x8xf32>
      %20 = arith.mulf %19, %14 : vector<8x8xf32>
      %21 = arith.extf %18 : vector<8x8xbf16> to vector<8x8xf32>
      %22 = arith.mulf %21, %15 : vector<8x8xf32>
      %23 = arith.addf %20, %22 : vector<8x8xf32>
      %cst = arith.constant 0.353553385 : f32
      %24 = vector.broadcast %cst : f32 to vector<8x8xf32>
      %25 = arith.mulf %23, %24 : vector<8x8xf32>
      %c0_13 = arith.constant 0 : index
      %c0_14 = arith.constant 0 : index
      %c0_15 = arith.constant 0 : index
      %c0_16 = arith.constant 0 : index
      %c0_17 = arith.constant 0 : index
      %26 = vector.load %arg5[%c0_13, %c0_14, %c0_15, %c0_16, %c0_17] : memref<1x1x1x8x8xbf16, #tpu.memory_space<vmem>>, vector<1x1x1x8x8xbf16>
      %27 = vector.shape_cast %26 : vector<1x1x1x8x8xbf16> to vector<8x8xbf16>
      %c0_18 = arith.constant 0 : index
      %c0_19 = arith.constant 0 : index
      %28 = vector.load %arg9[%c0_18, %c0_19] : memref<8x8xf32, #tpu.memory_space<vmem>>, vector<8x8xf32>
      %c0_20 = arith.constant 0 : index
      %c0_21 = arith.constant 0 : index
      %29 = vector.load %arg10[%c0_20, %c0_21] : memref<8x8xf32, #tpu.memory_space<vmem>>, vector<8x8xf32>
      %30 = vector.extract_strided_slice %27 {offsets = [0, 4], sizes = [8, 4], strides = [1, 1]} : vector<8x8xbf16> to vector<8x4xbf16>
      %31 = vector.extract_strided_slice %27 {offsets = [0, 0], sizes = [8, 4], strides = [1, 1]} : vector<8x8xbf16> to vector<8x4xbf16>
      %32 = tpu.concatenate %30, %31 in 1 : vector<8x4xbf16>, vector<8x4xbf16> -> vector<8x8xbf16>
      %33 = arith.extf %27 : vector<8x8xbf16> to vector<8x8xf32>
      %34 = arith.mulf %33, %28 : vector<8x8xf32>
      %35 = arith.extf %32 : vector<8x8xbf16> to vector<8x8xf32>
      %36 = arith.mulf %35, %29 : vector<8x8xf32>
      %37 = arith.addf %34, %36 : vector<8x8xf32>
      %c0_22 = arith.constant 0 : index
      %c0_23 = arith.constant 0 : index
      %c0_24 = arith.constant 0 : index
      %c0_25 = arith.constant 0 : index
      %c0_26 = arith.constant 0 : index
      %38 = vector.load %arg6[%c0_22, %c0_23, %c0_24, %c0_25, %c0_26] : memref<1x1x1x8x8xbf16, #tpu.memory_space<vmem>>, vector<1x1x1x8x8xbf16>
      %39 = vector.shape_cast %38 : vector<1x1x1x8x8xbf16> to vector<8x8xbf16>
      %40 = arith.truncf %25 : vector<8x8xf32> to vector<8x8xbf16>
      %41 = arith.truncf %37 : vector<8x8xf32> to vector<8x8xbf16>
      %cst_27 = arith.constant dense<0.000000e+00> : vector<8x8xf32>
      %42 = tpu.matmul %40, %41, %cst_27 {dimension_numbers = #tpu.dot_dimension_numbers<[1], [1], [0], [0], [0, 0, 1, 0], [], []>} : vector<8x8xbf16>, vector<8x8xbf16>, vector<8x8xf32> -> vector<8x8xf32>
      %c8_i32 = arith.constant 8 : i32
      %43 = arith.muli %arg2, %c8_i32 : i32
      %44 = tpu.iota {dimensions = array<i32: 0>} : vector<8x8xi32>
      %45 = vector.broadcast %43 : i32 to vector<8x8xi32>
      %46 = arith.addi %45, %44 : vector<8x8xi32>
      %c8_i32_28 = arith.constant 8 : i32
      %47 = arith.muli %arg3, %c8_i32_28 : i32
      %48 = tpu.iota {dimensions = array<i32: 1>} : vector<8x8xi32>
      %49 = vector.broadcast %47 : i32 to vector<8x8xi32>
      %50 = arith.addi %49, %48 : vector<8x8xi32>
      %51 = arith.cmpi sle, %50, %46 : vector<8x8xi32>
      %cst_29 = arith.constant -1.000000e+09 : f32
      %52 = vector.broadcast %cst_29 : f32 to vector<8x8xf32>
      %53 = arith.select %51, %42, %52 : vector<8x8xi1>, vector<8x8xf32>
      %c0_30 = arith.constant 0 : index
      %c0_31 = arith.constant 0 : index
      %54 = vector.load %arg12[%c0_30, %c0_31] : memref<8x1xf32, #tpu.memory_space<vmem>>, vector<8x1xf32>
      %cst_32 = arith.constant dense<0xFF800000> : vector<8xf32>
      %55 = vector.multi_reduction <maximumf>, %53, %cst_32 [1] : vector<8x8xf32> to vector<8xf32>
      %56 = vector.shape_cast %55 : vector<8xf32> to vector<8x1xf32>
      %57 = arith.maximumf %54, %56 : vector<8x1xf32>
      %58 = arith.subf %54, %57 : vector<8x1xf32>
      %59 = math.exp %58 : vector<8x1xf32>
      %60 = vector.broadcast %57 : vector<8x1xf32> to vector<8x8xf32>
      %61 = arith.subf %53, %60 : vector<8x8xf32>
      %62 = math.exp %61 : vector<8x8xf32>
      %c0_33 = arith.constant 0 : index
      %c0_34 = arith.constant 0 : index
      %63 = vector.load %arg13[%c0_33, %c0_34] : memref<8x1xf32, #tpu.memory_space<vmem>>, vector<8x1xf32>
      %64 = arith.mulf %59, %63 : vector<8x1xf32>
      %cst_35 = arith.constant dense<0.000000e+00> : vector<8xf32>
      %65 = vector.multi_reduction <add>, %62, %cst_35 [1] : vector<8x8xf32> to vector<8xf32>
      %66 = vector.shape_cast %65 : vector<8xf32> to vector<8x1xf32>
      %67 = arith.addf %64, %66 : vector<8x1xf32>
      %c0_36 = arith.constant 0 : index
      %c0_37 = arith.constant 0 : index
      %68 = vector.load %arg13[%c0_36, %c0_37] : memref<8x1xf32, #tpu.memory_space<vmem>>, vector<8x1xf32>
      tpu.vector_store %arg13[%c0_36, %c0_37], %67 {strides = array<i32>} : memref<8x1xf32, #tpu.memory_space<vmem>>, vector<8x1xf32>,
      %c0_38 = arith.constant 0 : index
      %c0_39 = arith.constant 0 : index
      %69 = vector.load %arg14[%c0_38, %c0_39] : memref<8x8xf32, #tpu.memory_space<vmem>>, vector<8x8xf32>
      %70 = vector.broadcast %59 : vector<8x1xf32> to vector<8x8xf32>
      %71 = arith.mulf %70, %69 : vector<8x8xf32>
      %72 = arith.truncf %62 : vector<8x8xf32> to vector<8x8xbf16>
      %cst_40 = arith.constant dense<0.000000e+00> : vector<8x8xf32>
      %73 = tpu.matmul %72, %39, %cst_40 {dimension_numbers = #tpu.dot_dimension_numbers<[1], [0], [0], [1], [0, 0, 1, 1], [], []>} : vector<8x8xbf16>, vector<8x8xbf16>, vector<8x8xf32> -> vector<8x8xf32>
      %74 = arith.addf %71, %73 : vector<8x8xf32>
      %c0_41 = arith.constant 0 : index
      %c0_42 = arith.constant 0 : index
      %75 = vector.load %arg14[%c0_41, %c0_42] : memref<8x8xf32, #tpu.memory_space<vmem>>, vector<8x8xf32>
      tpu.vector_store %arg14[%c0_41, %c0_42], %74 {strides = array<i32>} : memref<8x8xf32, #tpu.memory_space<vmem>>, vector<8x8xf32>,
      %c0_43 = arith.constant 0 : index
      %c0_44 = arith.constant 0 : index
      %76 = vector.load %arg12[%c0_43, %c0_44] : memref<8x1xf32, #tpu.memory_space<vmem>>, vector<8x1xf32>
      tpu.vector_store %arg12[%c0_43, %c0_44], %57 {strides = array<i32>} : memref<8x1xf32, #tpu.memory_space<vmem>>, vector<8x1xf32>,
    } else {
    }
    %6 = arith.cmpi slt, %arg3, %arg2 : i32
    %7 = arith.extui %6 : i1 to i32
    %c0_i32_2 = arith.constant 0 : i32
    %8 = arith.cmpi ne, %7, %c0_i32_2 : i32
    scf.if %8 {
      %c0 = arith.constant 0 : index
      %c0_5 = arith.constant 0 : index
      %c0_6 = arith.constant 0 : index
      %c0_7 = arith.constant 0 : index
      %c0_8 = arith.constant 0 : index
      %12 = vector.load %arg4[%c0, %c0_5, %c0_6, %c0_7, %c0_8] : memref<1x1x1x8x8xbf16, #tpu.memory_space<vmem>>, vector<1x1x1x8x8xbf16>
      %13 = vector.shape_cast %12 : vector<1x1x1x8x8xbf16> to vector<8x8xbf16>
      %c0_9 = arith.constant 0 : index
      %c0_10 = arith.constant 0 : index
      %14 = vector.load %arg7[%c0_9, %c0_10] : memref<8x8xf32, #tpu.memory_space<vmem>>, vector<8x8xf32>
      %c0_11 = arith.constant 0 : index
      %c0_12 = arith.constant 0 : index
      %15 = vector.load %arg8[%c0_11, %c0_12] : memref<8x8xf32, #tpu.memory_space<vmem>>, vector<8x8xf32>
      %16 = vector.extract_strided_slice %13 {offsets = [0, 4], sizes = [8, 4], strides = [1, 1]} : vector<8x8xbf16> to vector<8x4xbf16>
      %17 = vector.extract_strided_slice %13 {offsets = [0, 0], sizes = [8, 4], strides = [1, 1]} : vector<8x8xbf16> to vector<8x4xbf16>
      %18 = tpu.concatenate %16, %17 in 1 : vector<8x4xbf16>, vector<8x4xbf16> -> vector<8x8xbf16>
      %19 = arith.extf %13 : vector<8x8xbf16> to vector<8x8xf32>
      %20 = arith.mulf %19, %14 : vector<8x8xf32>
      %21 = arith.extf %18 : vector<8x8xbf16> to vector<8x8xf32>
      %22 = arith.mulf %21, %15 : vector<8x8xf32>
      %23 = arith.addf %20, %22 : vector<8x8xf32>
      %cst = arith.constant 0.353553385 : f32
      %24 = vector.broadcast %cst : f32 to vector<8x8xf32>
      %25 = arith.mulf %23, %24 : vector<8x8xf32>
      %c0_13 = arith.constant 0 : index
      %c0_14 = arith.constant 0 : index
      %c0_15 = arith.constant 0 : index
      %c0_16 = arith.constant 0 : index
      %c0_17 = arith.constant 0 : index
      %26 = vector.load %arg5[%c0_13, %c0_14, %c0_15, %c0_16, %c0_17] : memref<1x1x1x8x8xbf16, #tpu.memory_space<vmem>>, vector<1x1x1x8x8xbf16>
      %27 = vector.shape_cast %26 : vector<1x1x1x8x8xbf16> to vector<8x8xbf16>
      %c0_18 = arith.constant 0 : index
      %c0_19 = arith.constant 0 : index
      %28 = vector.load %arg9[%c0_18, %c0_19] : memref<8x8xf32, #tpu.memory_space<vmem>>, vector<8x8xf32>
      %c0_20 = arith.constant 0 : index
      %c0_21 = arith.constant 0 : index
      %29 = vector.load %arg10[%c0_20, %c0_21] : memref<8x8xf32, #tpu.memory_space<vmem>>, vector<8x8xf32>
      %30 = vector.extract_strided_slice %27 {offsets = [0, 4], sizes = [8, 4], strides = [1, 1]} : vector<8x8xbf16> to vector<8x4xbf16>
      %31 = vector.extract_strided_slice %27 {offsets = [0, 0], sizes = [8, 4], strides = [1, 1]} : vector<8x8xbf16> to vector<8x4xbf16>
      %32 = tpu.concatenate %30, %31 in 1 : vector<8x4xbf16>, vector<8x4xbf16> -> vector<8x8xbf16>
      %33 = arith.extf %27 : vector<8x8xbf16> to vector<8x8xf32>
      %34 = arith.mulf %33, %28 : vector<8x8xf32>
      %35 = arith.extf %32 : vector<8x8xbf16> to vector<8x8xf32>
      %36 = arith.mulf %35, %29 : vector<8x8xf32>
      %37 = arith.addf %34, %36 : vector<8x8xf32>
      %c0_22 = arith.constant 0 : index
      %c0_23 = arith.constant 0 : index
      %c0_24 = arith.constant 0 : index
      %c0_25 = arith.constant 0 : index
      %c0_26 = arith.constant 0 : index
      %38 = vector.load %arg6[%c0_22, %c0_23, %c0_24, %c0_25, %c0_26] : memref<1x1x1x8x8xbf16, #tpu.memory_space<vmem>>, vector<1x1x1x8x8xbf16>
      %39 = vector.shape_cast %38 : vector<1x1x1x8x8xbf16> to vector<8x8xbf16>
      %40 = arith.truncf %25 : vector<8x8xf32> to vector<8x8xbf16>
      %41 = arith.truncf %37 : vector<8x8xf32> to vector<8x8xbf16>
      %cst_27 = arith.constant dense<0.000000e+00> : vector<8x8xf32>
      %42 = tpu.matmul %40, %41, %cst_27 {dimension_numbers = #tpu.dot_dimension_numbers<[1], [1], [0], [0], [0, 0, 1, 0], [], []>} : vector<8x8xbf16>, vector<8x8xbf16>, vector<8x8xf32> -> vector<8x8xf32>
      %c0_28 = arith.constant 0 : index
      %c0_29 = arith.constant 0 : index
      %43 = vector.load %arg12[%c0_28, %c0_29] : memref<8x1xf32, #tpu.memory_space<vmem>>, vector<8x1xf32>
      %cst_30 = arith.constant dense<0xFF800000> : vector<8xf32>
      %44 = vector.multi_reduction <maximumf>, %42, %cst_30 [1] : vector<8x8xf32> to vector<8xf32>
      %45 = vector.shape_cast %44 : vector<8xf32> to vector<8x1xf32>
      %46 = arith.maximumf %43, %45 : vector<8x1xf32>
      %47 = arith.subf %43, %46 : vector<8x1xf32>
      %48 = math.exp %47 : vector<8x1xf32>
      %49 = vector.broadcast %46 : vector<8x1xf32> to vector<8x8xf32>
      %50 = arith.subf %42, %49 : vector<8x8xf32>
      %51 = math.exp %50 : vector<8x8xf32>
      %c0_31 = arith.constant 0 : index
      %c0_32 = arith.constant 0 : index
      %52 = vector.load %arg13[%c0_31, %c0_32] : memref<8x1xf32, #tpu.memory_space<vmem>>, vector<8x1xf32>
      %53 = arith.mulf %48, %52 : vector<8x1xf32>
      %cst_33 = arith.constant dense<0.000000e+00> : vector<8xf32>
      %54 = vector.multi_reduction <add>, %51, %cst_33 [1] : vector<8x8xf32> to vector<8xf32>
      %55 = vector.shape_cast %54 : vector<8xf32> to vector<8x1xf32>
      %56 = arith.addf %53, %55 : vector<8x1xf32>
      %c0_34 = arith.constant 0 : index
      %c0_35 = arith.constant 0 : index
      %57 = vector.load %arg13[%c0_34, %c0_35] : memref<8x1xf32, #tpu.memory_space<vmem>>, vector<8x1xf32>
      tpu.vector_store %arg13[%c0_34, %c0_35], %56 {strides = array<i32>} : memref<8x1xf32, #tpu.memory_space<vmem>>, vector<8x1xf32>,
      %c0_36 = arith.constant 0 : index
      %c0_37 = arith.constant 0 : index
      %58 = vector.load %arg14[%c0_36, %c0_37] : memref<8x8xf32, #tpu.memory_space<vmem>>, vector<8x8xf32>
      %59 = vector.broadcast %48 : vector<8x1xf32> to vector<8x8xf32>
      %60 = arith.mulf %59, %58 : vector<8x8xf32>
      %61 = arith.truncf %51 : vector<8x8xf32> to vector<8x8xbf16>
      %cst_38 = arith.constant dense<0.000000e+00> : vector<8x8xf32>
      %62 = tpu.matmul %61, %39, %cst_38 {dimension_numbers = #tpu.dot_dimension_numbers<[1], [0], [0], [1], [0, 0, 1, 1], [], []>} : vector<8x8xbf16>, vector<8x8xbf16>, vector<8x8xf32> -> vector<8x8xf32>
      %63 = arith.addf %60, %62 : vector<8x8xf32>
      %c0_39 = arith.constant 0 : index
      %c0_40 = arith.constant 0 : index
      %64 = vector.load %arg14[%c0_39, %c0_40] : memref<8x8xf32, #tpu.memory_space<vmem>>, vector<8x8xf32>
      tpu.vector_store %arg14[%c0_39, %c0_40], %63 {strides = array<i32>} : memref<8x8xf32, #tpu.memory_space<vmem>>, vector<8x8xf32>,
      %c0_41 = arith.constant 0 : index
      %c0_42 = arith.constant 0 : index
      %65 = vector.load %arg12[%c0_41, %c0_42] : memref<8x1xf32, #tpu.memory_space<vmem>>, vector<8x1xf32>
      tpu.vector_store %arg12[%c0_41, %c0_42], %46 {strides = array<i32>} : memref<8x1xf32, #tpu.memory_space<vmem>>, vector<8x1xf32>,
    } else {
    }
    %c0_i32_3 = arith.constant 0 : i32
    %9 = arith.cmpi eq, %arg3, %c0_i32_3 : i32
    %10 = arith.extui %9 : i1 to i32
    %c0_i32_4 = arith.constant 0 : i32
    %11 = arith.cmpi ne, %10, %c0_i32_4 : i32
    scf.if %11 {
      %c0 = arith.constant 0 : index
      %c0_5 = arith.constant 0 : index
      %12 = vector.load %arg13[%c0, %c0_5] : memref<8x1xf32, #tpu.memory_space<vmem>>, vector<8x1xf32>
      %13 = tpu.reciprocal %12 {approx = true} : vector<8x1xf32> -> vector<8x1xf32>
      %c0_6 = arith.constant 0 : index
      %c0_7 = arith.constant 0 : index
      %14 = vector.load %arg14[%c0_6, %c0_7] : memref<8x8xf32, #tpu.memory_space<vmem>>, vector<8x8xf32>
      %15 = vector.broadcast %13 : vector<8x1xf32> to vector<8x8xf32>
      %16 = arith.mulf %14, %15 : vector<8x8xf32>
      %17 = arith.truncf %16 : vector<8x8xf32> to vector<8x8xbf16>
      %c0_8 = arith.constant 0 : index
      %c0_9 = arith.constant 0 : index
      %c0_10 = arith.constant 0 : index
      %c0_11 = arith.constant 0 : index
      %18 = vector.load %arg11[%c0_8, %c0_9, %c0_10, %c0_11] : memref<1x1x8x8xbf16, #tpu.memory_space<vmem>>, vector<1x1x8x8xbf16>
      %19 = vector.shape_cast %18 : vector<1x1x8x8xbf16> to vector<8x8xbf16>
      %20 = vector.shape_cast %17 : vector<8x8xbf16> to vector<1x1x8x8xbf16>
      tpu.vector_store %arg11[%c0_8, %c0_9, %c0_10, %c0_11], %20 {strides = array<i32>} : memref<1x1x8x8xbf16, #tpu.memory_space<vmem>>, vector<1x1x8x8xbf16>,
    } else {
    }
    return
  }
  func.func @transform_0(%arg0: i32, %arg1: i32, %arg2: i32, %arg3: i32) -> (i32, i32, i32, i32, i32) {
    %c0_i32 = arith.constant 0 : i32
    %c0_i32_0 = arith.constant 0 : i32
    %c0_i32_1 = arith.constant 0 : i32
    return %c0_i32, %arg1, %arg0, %arg2, %c0_i32_0 : i32, i32, i32, i32, i32
  }
  func.func @transform_1(%arg0: i32, %arg1: i32, %arg2: i32, %arg3: i32) -> (i32, i32, i32, i32, i32) {
    %c1_i32 = arith.constant 1 : i32
    %c0_i32 = arith.constant 0 : i32
    %c0_i32_0 = arith.constant 0 : i32
    return %c1_i32, %arg1, %arg0, %arg3, %c0_i32 : i32, i32, i32, i32, i32
  }
  func.func @transform_2(%arg0: i32, %arg1: i32, %arg2: i32, %arg3: i32) -> (i32, i32, i32, i32, i32) {
    %c2_i32 = arith.constant 2 : i32
    %c0_i32 = arith.constant 0 : i32
    %c0_i32_0 = arith.constant 0 : i32
    return %c2_i32, %arg1, %arg0, %arg3, %c0_i32 : i32, i32, i32, i32, i32
  }
  func.func @transform_3(%arg0: i32, %arg1: i32, %arg2: i32, %arg3: i32) -> (i32, i32) {
    %c0_i32 = arith.constant 0 : i32
    %c0_i32_0 = arith.constant 0 : i32
    return %arg2, %c0_i32 : i32, i32
  }
  func.func @transform_4(%arg0: i32, %arg1: i32, %arg2: i32, %arg3: i32) -> (i32, i32) {
    %c0_i32 = arith.constant 0 : i32
    %c0_i32_0 = arith.constant 0 : i32
    return %arg2, %c0_i32 : i32, i32
  }
  func.func @transform_5(%arg0: i32, %arg1: i32, %arg2: i32, %arg3: i32) -> (i32, i32) {
    %c0_i32 = arith.constant 0 : i32
    %c0_i32_0 = arith.constant 0 : i32
    return %arg3, %c0_i32 : i32, i32
  }
  func.func @transform_6(%arg0: i32, %arg1: i32, %arg2: i32, %arg3: i32) -> (i32, i32) {
    %c0_i32 = arith.constant 0 : i32
    %c0_i32_0 = arith.constant 0 : i32
    return %arg3, %c0_i32 : i32, i32
  }
  func.func @transform_7(%arg0: i32, %arg1: i32, %arg2: i32, %arg3: i32) -> (i32, i32, i32, i32) {
    %c0_i32 = arith.constant 0 : i32
    %c0_i32_0 = arith.constant 0 : i32
    return %arg1, %arg0, %arg2, %c0_i32 : i32, i32, i32, i32
  }
}

module attributes {stable_mosaic.version = 11 : i64} {
  func.func @_out_proj_kernel(%arg0: i32, %arg1: i32, %arg2: i32, %arg3: memref<1x16x8xbf16, #tpu.memory_space<vmem>>, %arg4: memref<1x8x32xbf16, #tpu.memory_space<vmem>>, %arg5: memref<1x32xf32, #tpu.memory_space<vmem>>, %arg6: memref<16x32xf32, #tpu.memory_space<vmem>>, %arg7: memref<16x32xf32, #tpu.memory_space<vmem>>) attributes {dimension_semantics = [#tpu.dimension_semantics<parallel>, #tpu.dimension_semantics<parallel>, #tpu.dimension_semantics<arbitrary>], iteration_bounds = array<i64: 1, 1, 4>, scalar_prefetch = 0 : i64, scratch_operands = 0 : i64, tpu.core_type = #tpu.core_type<tc>, window_params = [{transform_indices = @transform_0, window_bounds = array<i64: 1, 16, 8>}, {transform_indices = @transform_1, window_bounds = array<i64: 1, 8, 32>}, {transform_indices = @transform_2, window_bounds = array<i64: 1, 32>}, {transform_indices = @transform_3, window_bounds = array<i64: 16, 32>}, {transform_indices = @transform_4, window_bounds = array<i64: 16, 32>}]} {
    %c0_i32 = arith.constant 0 : i32
    %0 = arith.cmpi eq, %arg2, %c0_i32 : i32
    %1 = arith.extui %0 : i1 to i32
    %c0_i32_0 = arith.constant 0 : i32
    %2 = arith.cmpi ne, %1, %c0_i32_0 : i32
    scf.if %2 {
      %c0_10 = arith.constant 0 : index
      %c0_11 = arith.constant 0 : index
      %11 = vector.load %arg6[%c0_10, %c0_11] : memref<16x32xf32, #tpu.memory_space<vmem>>, vector<16x32xf32>
      %c0_12 = arith.constant 0 : index
      %c0_13 = arith.constant 0 : index
      %12 = vector.load %arg5[%c0_12, %c0_13] : memref<1x32xf32, #tpu.memory_space<vmem>>, vector<1x32xf32>
      %13 = vector.broadcast %12 : vector<1x32xf32> to vector<16x32xf32>
      %14 = arith.addf %11, %13 : vector<16x32xf32>
      %c0_14 = arith.constant 0 : index
      %c0_15 = arith.constant 0 : index
      %15 = vector.load %arg7[%c0_14, %c0_15] : memref<16x32xf32, #tpu.memory_space<vmem>>, vector<16x32xf32>
      tpu.vector_store %arg7[%c0_14, %c0_15], %14 {strides = array<i32>} : memref<16x32xf32, #tpu.memory_space<vmem>>, vector<16x32xf32>,
    } else {
    }
    %c0 = arith.constant 0 : index
    %c0_1 = arith.constant 0 : index
    %3 = vector.load %arg7[%c0, %c0_1] : memref<16x32xf32, #tpu.memory_space<vmem>>, vector<16x32xf32>
    %c0_2 = arith.constant 0 : index
    %c0_3 = arith.constant 0 : index
    %c0_4 = arith.constant 0 : index
    %4 = vector.load %arg3[%c0_2, %c0_3, %c0_4] : memref<1x16x8xbf16, #tpu.memory_space<vmem>>, vector<1x16x8xbf16>
    %5 = vector.shape_cast %4 : vector<1x16x8xbf16> to vector<16x8xbf16>
    %c0_5 = arith.constant 0 : index
    %c0_6 = arith.constant 0 : index
    %c0_7 = arith.constant 0 : index
    %6 = vector.load %arg4[%c0_5, %c0_6, %c0_7] : memref<1x8x32xbf16, #tpu.memory_space<vmem>>, vector<1x8x32xbf16>
    %7 = vector.shape_cast %6 : vector<1x8x32xbf16> to vector<8x32xbf16>
    %cst = arith.constant dense<0.000000e+00> : vector<16x32xf32>
    %8 = tpu.matmul %5, %7, %cst {dimension_numbers = #tpu.dot_dimension_numbers<[1], [0], [0], [1], [0, 0, 1, 1], [], []>} : vector<16x8xbf16>, vector<8x32xbf16>, vector<16x32xf32> -> vector<16x32xf32>
    %9 = arith.addf %3, %8 : vector<16x32xf32>
    %c0_8 = arith.constant 0 : index
    %c0_9 = arith.constant 0 : index
    %10 = vector.load %arg7[%c0_8, %c0_9] : memref<16x32xf32, #tpu.memory_space<vmem>>, vector<16x32xf32>
    tpu.vector_store %arg7[%c0_8, %c0_9], %9 {strides = array<i32>} : memref<16x32xf32, #tpu.memory_space<vmem>>, vector<16x32xf32>,
    return
  }
  func.func @transform_0(%arg0: i32, %arg1: i32, %arg2: i32) -> (i32, i32, i32) {
    %c0_i32 = arith.constant 0 : i32
    %c0_i32_0 = arith.constant 0 : i32
    return %arg2, %arg0, %c0_i32 : i32, i32, i32
  }
  func.func @transform_1(%arg0: i32, %arg1: i32, %arg2: i32) -> (i32, i32, i32) {
    %c0_i32 = arith.constant 0 : i32
    %c0_i32_0 = arith.constant 0 : i32
    return %arg2, %c0_i32, %arg1 : i32, i32, i32
  }
  func.func @transform_2(%arg0: i32, %arg1: i32, %arg2: i32) -> (i32, i32) {
    %c0_i32 = arith.constant 0 : i32
    %c0_i32_0 = arith.constant 0 : i32
    return %c0_i32, %arg1 : i32, i32
  }
  func.func @transform_3(%arg0: i32, %arg1: i32, %arg2: i32) -> (i32, i32) {
    %c0_i32 = arith.constant 0 : i32
    return %arg0, %arg1 : i32, i32
  }
  func.func @transform_4(%arg0: i32, %arg1: i32, %arg2: i32) -> (i32, i32) {
    %c0_i32 = arith.constant 0 : i32
    return %arg0, %arg1 : i32, i32
  }
}

module attributes {stable_mosaic.version = 11 : i64} {
  func.func @_ffn_kernel(%arg0: i32, %arg1: i32, %arg2: memref<16x32xf32, #tpu.memory_space<vmem>>, %arg3: memref<1x32xf32, #tpu.memory_space<vmem>>, %arg4: memref<32x64xbf16, #tpu.memory_space<vmem>>, %arg5: memref<32x64xbf16, #tpu.memory_space<vmem>>, %arg6: memref<64x32xbf16, #tpu.memory_space<vmem>>, %arg7: memref<16x32xf32, #tpu.memory_space<vmem>>, %arg8: memref<16x32xbf16, #tpu.memory_space<vmem>>) attributes {dimension_semantics = [#tpu.dimension_semantics<parallel>, #tpu.dimension_semantics<arbitrary>], iteration_bounds = array<i64: 1, 1>, scalar_prefetch = 0 : i64, scratch_operands = 1 : i64, tpu.core_type = #tpu.core_type<tc>, window_params = [{transform_indices = @transform_0, window_bounds = array<i64: 16, 32>}, {pipeline_mode = #tpu.pipeline_mode<synchronous>, transform_indices = @transform_1, window_bounds = array<i64: 1, 32>}, {transform_indices = @transform_2, window_bounds = array<i64: 32, 64>}, {transform_indices = @transform_3, window_bounds = array<i64: 32, 64>}, {transform_indices = @transform_4, window_bounds = array<i64: 64, 32>}, {transform_indices = @transform_5, window_bounds = array<i64: 16, 32>}]} {
    %c0_i32 = arith.constant 0 : i32
    %0 = arith.cmpi eq, %arg1, %c0_i32 : i32
    %1 = arith.extui %0 : i1 to i32
    %c0_i32_0 = arith.constant 0 : i32
    %2 = arith.cmpi ne, %1, %c0_i32_0 : i32
    scf.if %2 {
      %c0_15 = arith.constant 0 : index
      %c0_16 = arith.constant 0 : index
      %21 = vector.load %arg2[%c0_15, %c0_16] : memref<16x32xf32, #tpu.memory_space<vmem>>, vector<16x32xf32>
      %22 = arith.mulf %21, %21 : vector<16x32xf32>
      %cst_17 = arith.constant dense<0.000000e+00> : vector<16xf32>
      %23 = vector.multi_reduction <add>, %22, %cst_17 [1] : vector<16x32xf32> to vector<16xf32>
      %24 = vector.shape_cast %23 : vector<16xf32> to vector<16x1xf32>
      %cst_18 = arith.constant 3.200000e+01 : f32
      %25 = vector.broadcast %cst_18 : f32 to vector<16x1xf32>
      %26 = arith.divf %24, %25 : vector<16x1xf32>
      %cst_19 = arith.constant 9.99999997E-7 : f32
      %27 = vector.broadcast %cst_19 : f32 to vector<16x1xf32>
      %28 = arith.addf %26, %27 : vector<16x1xf32>
      %29 = math.rsqrt %28 : vector<16x1xf32>
      %30 = vector.broadcast %29 : vector<16x1xf32> to vector<16x32xf32>
      %31 = arith.mulf %21, %30 : vector<16x32xf32>
      %c0_20 = arith.constant 0 : index
      %c0_21 = arith.constant 0 : index
      %32 = vector.load %arg3[%c0_20, %c0_21] : memref<1x32xf32, #tpu.memory_space<vmem>>, vector<1x32xf32>
      %33 = vector.broadcast %32 : vector<1x32xf32> to vector<16x32xf32>
      %34 = arith.mulf %31, %33 : vector<16x32xf32>
      %35 = arith.truncf %34 : vector<16x32xf32> to vector<16x32xbf16>
      %c0_22 = arith.constant 0 : index
      %c0_23 = arith.constant 0 : index
      %36 = vector.load %arg8[%c0_22, %c0_23] : memref<16x32xbf16, #tpu.memory_space<vmem>>, vector<16x32xbf16>
      tpu.vector_store %arg8[%c0_22, %c0_23], %35 {strides = array<i32>} : memref<16x32xbf16, #tpu.memory_space<vmem>>, vector<16x32xbf16>,
      %c0_24 = arith.constant 0 : index
      %c0_25 = arith.constant 0 : index
      %37 = vector.load %arg7[%c0_24, %c0_25] : memref<16x32xf32, #tpu.memory_space<vmem>>, vector<16x32xf32>
      tpu.vector_store %arg7[%c0_24, %c0_25], %21 {strides = array<i32>} : memref<16x32xf32, #tpu.memory_space<vmem>>, vector<16x32xf32>,
    } else {
    }
    %c0 = arith.constant 0 : index
    %c0_1 = arith.constant 0 : index
    %3 = vector.load %arg8[%c0, %c0_1] : memref<16x32xbf16, #tpu.memory_space<vmem>>, vector<16x32xbf16>
    %c0_2 = arith.constant 0 : index
    %c0_3 = arith.constant 0 : index
    %4 = vector.load %arg4[%c0_2, %c0_3] : memref<32x64xbf16, #tpu.memory_space<vmem>>, vector<32x64xbf16>
    %cst = arith.constant dense<0.000000e+00> : vector<16x64xf32>
    %5 = tpu.matmul %3, %4, %cst {dimension_numbers = #tpu.dot_dimension_numbers<[1], [0], [0], [1], [0, 0, 1, 1], [], []>} : vector<16x32xbf16>, vector<32x64xbf16>, vector<16x64xf32> -> vector<16x64xf32>
    %c0_4 = arith.constant 0 : index
    %c0_5 = arith.constant 0 : index
    %6 = vector.load %arg5[%c0_4, %c0_5] : memref<32x64xbf16, #tpu.memory_space<vmem>>, vector<32x64xbf16>
    %cst_6 = arith.constant dense<0.000000e+00> : vector<16x64xf32>
    %7 = tpu.matmul %3, %6, %cst_6 {dimension_numbers = #tpu.dot_dimension_numbers<[1], [0], [0], [1], [0, 0, 1, 1], [], []>} : vector<16x32xbf16>, vector<32x64xbf16>, vector<16x64xf32> -> vector<16x64xf32>
    %8 = arith.negf %7 : vector<16x64xf32>
    %9 = math.exp %8 : vector<16x64xf32>
    %cst_7 = arith.constant 1.000000e+00 : f32
    %10 = vector.broadcast %cst_7 : f32 to vector<16x64xf32>
    %11 = arith.addf %10, %9 : vector<16x64xf32>
    %12 = arith.divf %10, %11 : vector<16x64xf32>
    %13 = arith.mulf %7, %12 : vector<16x64xf32>
    %14 = arith.mulf %5, %13 : vector<16x64xf32>
    %c0_8 = arith.constant 0 : index
    %c0_9 = arith.constant 0 : index
    %15 = vector.load %arg7[%c0_8, %c0_9] : memref<16x32xf32, #tpu.memory_space<vmem>>, vector<16x32xf32>
    %16 = arith.truncf %14 : vector<16x64xf32> to vector<16x64xbf16>
    %c0_10 = arith.constant 0 : index
    %c0_11 = arith.constant 0 : index
    %17 = vector.load %arg6[%c0_10, %c0_11] : memref<64x32xbf16, #tpu.memory_space<vmem>>, vector<64x32xbf16>
    %cst_12 = arith.constant dense<0.000000e+00> : vector<16x32xf32>
    %18 = tpu.matmul %16, %17, %cst_12 {dimension_numbers = #tpu.dot_dimension_numbers<[1], [0], [0], [1], [0, 0, 1, 1], [], []>} : vector<16x64xbf16>, vector<64x32xbf16>, vector<16x32xf32> -> vector<16x32xf32>
    %19 = arith.addf %15, %18 : vector<16x32xf32>
    %c0_13 = arith.constant 0 : index
    %c0_14 = arith.constant 0 : index
    %20 = vector.load %arg7[%c0_13, %c0_14] : memref<16x32xf32, #tpu.memory_space<vmem>>, vector<16x32xf32>
    tpu.vector_store %arg7[%c0_13, %c0_14], %19 {strides = array<i32>} : memref<16x32xf32, #tpu.memory_space<vmem>>, vector<16x32xf32>,
    return
  }
  func.func @transform_0(%arg0: i32, %arg1: i32) -> (i32, i32) {
    %c0_i32 = arith.constant 0 : i32
    %c0_i32_0 = arith.constant 0 : i32
    return %arg0, %c0_i32 : i32, i32
  }
  func.func @transform_1(%arg0: i32, %arg1: i32) -> (i32, i32) {
    %c0_i32 = arith.constant 0 : i32
    %c0_i32_0 = arith.constant 0 : i32
    %c0_i32_1 = arith.constant 0 : i32
    return %c0_i32, %c0_i32_0 : i32, i32
  }
  func.func @transform_2(%arg0: i32, %arg1: i32) -> (i32, i32) {
    %c0_i32 = arith.constant 0 : i32
    %c0_i32_0 = arith.constant 0 : i32
    return %c0_i32, %arg1 : i32, i32
  }
  func.func @transform_3(%arg0: i32, %arg1: i32) -> (i32, i32) {
    %c0_i32 = arith.constant 0 : i32
    %c0_i32_0 = arith.constant 0 : i32
    return %c0_i32, %arg1 : i32, i32
  }
  func.func @transform_4(%arg0: i32, %arg1: i32) -> (i32, i32) {
    %c0_i32 = arith.constant 0 : i32
    %c0_i32_0 = arith.constant 0 : i32
    return %arg1, %c0_i32 : i32, i32
  }
  func.func @transform_5(%arg0: i32, %arg1: i32) -> (i32, i32) {
    %c0_i32 = arith.constant 0 : i32
    %c0_i32_0 = arith.constant 0 : i32
    return %arg0, %c0_i32 : i32, i32
  }
}

</mosaic_0001>

<llo_original>
// kernel: decoder_block.4
$region0: #{decoder_block.4}
  #allocation0 [shape = 'u32[]', space=smem, size = 0x4, offset = 0x4, fixed_abs, tag = 'smem constant byte address 0x4 - core index']
  #allocation1 [shape = 'u32[144,128]{1,0:T(1,128)}', space=vmem, size = 0x12000, scoped, tag = 'internal scratch']
  #allocation2 [shape = 'bf16[16,32]{1,0:T(8,128)(2,1)}', space=vmem, size = 0x1000, scoped, tag = 'scratch operand']
  %s0 = inlined_call_operand.vmem [shape: f32[16,32], index: 0, kind: input, shape index: {}]
  %s1 = inlined_call_operand.vmem [shape: f32[1,32], index: 1, kind: input, shape index: {}]
  %s2 = inlined_call_operand.vmem [shape: bf16[3,4,32,8], index: 2, kind: input, shape index: {}]
  %s3 = inlined_call_operand.vmem [shape: f32[3,4,1,8], index: 3, kind: input, shape index: {}]
  %s4 = inlined_call_operand.vmem [shape: bf16[3,4,16,8], index: 4, kind: output, shape index: {}]
  %s5 = sld [smem:[#allocation0]]
  $region53: #{decoder_block.4} parent=0
    _
  %s7 = ssub.s32 1, %s5
  %s8 = scalar_select 0, %s7, %s5
  loop: start=0, step=1, limit=14
  $region2: #{decoder_block.4} parent=0 // loop_pre_header
    _
  $region3: #{decoder_block.4} parent=0 // loop_header
    %s10 = sphi 0, %s14
    %p11 = scmp.ge.s32.totalorder %s10, 14
    %s17 = sphi 0, %s36
    %s18 = sphi 0, %s32
    %s19 = sphi 0, %s28
    %s20 = sphi 0, %s17
    %s21 = sphi 0, %s18
    %s22 = sphi 0, %s19
    %s23 = sphi 0, %s20
    %s24 = sphi 0, %s21
    %s25 = sphi 0, %s22
    %s39 = sphi 0, %s41
    %s42 = sphi 0, %s39
    %s43 = sphi 0, %s42
    %s59 = sphi 0, %s43
    %s63 = sphi 0, %s63
    %s65 = sphi 0, %s63
    %s66 = sphi 0, %s65
    %s80 = sphi 0, %s66
    %s88 = sphi 0, %s90
    %s91 = sphi 0, %s88
    %s92 = sphi 0, %s91
    %s108 = sphi 0, %s92
    %s116 = sphi 0, %s118
    %s119 = sphi 0, %s116
    %s120 = sphi 0, %s119
    %s136 = sphi 0, %s120
    %s146 = sphi 0, %s148
    %s149 = sphi 0, %s146
    %s150 = sphi 0, %s149
    %s166 = sphi 0, %s150
  $region4: #{decoder_block.4} parent=0 // loop_header_branch
    %13 = sbr.rel (%p11) target = $region8
  $region5: #{decoder_block.4} parent=0 // loop_body
    %s15 = ssub.s32 %s10, 1
    %s16 = ssub.s32 %s10, 2
    %s26 = sadd.s32 1, %s19
    %p27 = scmp.ge.s32.totalorder %s26, 4
    %s28 = scalar_select %p27, 0, %s26
    %s29 = sadd.s32 1, %s18
    %s30 = scalar_select %p27, %s29, %s18
    %p31 = scmp.ge.s32.totalorder %s30, 3
    %s32 = scalar_select %p31, 0, %s30
    %s33 = sadd.s32 1, %s17
    %s34 = scalar_select %p31, %s33, %s17
    %p35 = scmp.ge.s32.totalorder %s34, 1
    %s36 = scalar_select %p35, 0, %s34
    %s37 = ssub.s32 %s17, %s36
    %p38 = scmp.eq.s32.totalorder %s37, 0
    %s40 = sadd.s32 %s39, 1
    %s41 = scalar_select %p38, %s39, %s40
    %p44 = pneg %p38
    %p45 = scmp.eq.s32.totalorder %s10, 11
    %p46 = por %p44, %p45
    %p47 = scmp.ne.s32.totalorder %s39, %s42
    %p48 = scmp.eq.s32.totalorder %s10, 0
    %p49 = por %p47, %p48
    %p50 = scmp.ne.s32.totalorder %s39, %s42
    %p51 = scmp.eq.s32.totalorder %s15, 11
    %p52 = por %p50, %p51
    %p53 = scmp.ne.s32.totalorder %s42, %s43
    %p54 = scmp.eq.s32.totalorder %s15, 0
    %p55 = por %p53, %p54
    %p56 = scmp.ne.s32.totalorder %s42, %s43
    %p57 = scmp.eq.s32.totalorder %s16, 11
    %p58 = por %p56, %p57
    %p60 = scmp.ne.s32.totalorder %s43, %s59
    %p61 = scmp.eq.s32.totalorder %s16, 0
    %p62 = por %p60, %p61
    %s64 = sadd.s32 %s63, 1
    %p67 = scmp.eq.s32.totalorder %s10, 11
    %p68 = scmp.ne.s32.totalorder %s63, %s65
    %p69 = scmp.eq.s32.totalorder %s10, 0
    %p70 = por %p68, %p69
    %p71 = scmp.ne.s32.totalorder %s63, %s65
    %p72 = scmp.eq.s32.totalorder %s15, 11
    %p73 = por %p71, %p72
    %p74 = scmp.ne.s32.totalorder %s65, %s66
    %p75 = scmp.eq.s32.totalorder %s15, 0
    %p76 = por %p74, %p75
    %p77 = scmp.ne.s32.totalorder %s65, %s66
    %p78 = scmp.eq.s32.totalorder %s16, 11
    %p79 = por %p77, %p78
    %p81 = scmp.ne.s32.totalorder %s66, %s80
    %p82 = scmp.eq.s32.totalorder %s16, 0
    %p83 = por %p81, %p82
    %s84 = ssub.s32 %s18, %s32
    %s85 = ssub.s32 %s19, %s28
    %s86 = sor.u32 %s84, %s85
    %p87 = scmp.eq.s32.totalorder %s86, 0
    %s89 = sadd.s32 %s88, 1
    %s90 = scalar_select %p87, %s88, %s89
    %p93 = pneg %p87
    %p94 = scmp.eq.s32.totalorder %s10, 11
    %p95 = por %p93, %p94
    %p96 = scmp.ne.s32.totalorder %s88, %s91
    %p97 = scmp.eq.s32.totalorder %s10, 0
    %p98 = por %p96, %p97
    %p99 = scmp.ne.s32.totalorder %s88, %s91
    %p100 = scmp.eq.s32.totalorder %s15, 11
    %p101 = por %p99, %p100
    %p102 = scmp.ne.s32.totalorder %s91, %s92
    %p103 = scmp.eq.s32.totalorder %s15, 0
    %p104 = por %p102, %p103
    %p105 = scmp.ne.s32.totalorder %s91, %s92
    %p106 = scmp.eq.s32.totalorder %s16, 11
    %p107 = por %p105, %p106
    %p109 = scmp.ne.s32.totalorder %s92, %s108
    %p110 = scmp.eq.s32.totalorder %s16, 0
    %p111 = por %p109, %p110
    %s112 = ssub.s32 %s18, %s32
    %s113 = ssub.s32 %s19, %s28
    %s114 = sor.u32 %s112, %s113
    %p115 = scmp.eq.s32.totalorder %s114, 0
    %s117 = sadd.s32 %s116, 1
    %s118 = scalar_select %p115, %s116, %s117
    %p121 = pneg %p115
    %p122 = scmp.eq.s32.totalorder %s10, 11
    %p123 = por %p121, %p122
    %p124 = scmp.ne.s32.totalorder %s116, %s119
    %p125 = scmp.eq.s32.totalorder %s10, 0
    %p126 = por %p124, %p125
    %p127 = scmp.ne.s32.totalorder %s116, %s119
    %p128 = scmp.eq.s32.totalorder %s15, 11
    %p129 = por %p127, %p128
    %p130 = scmp.ne.s32.totalorder %s119, %s120
    %p131 = scmp.eq.s32.totalorder %s15, 0
    %p132 = por %p130, %p131
    %p133 = scmp.ne.s32.totalorder %s119, %s120
    %p134 = scmp.eq.s32.totalorder %s16, 11
    %p135 = por %p133, %p134
    %p137 = scmp.ne.s32.totalorder %s120, %s136
    %p138 = scmp.eq.s32.totalorder %s16, 0
    %p139 = por %p137, %p138
    %s140 = ssub.s32 %s18, %s32
    %s141 = ssub.s32 %s19, %s28
    %s142 = sor.u32 %s140, %s141
    %s143 = ssub.s32 %s17, %s36
    %s144 = sor.u32 %s142, %s143
    %p145 = scmp.eq.s32.totalorder %s144, 0
    %s147 = sadd.s32 %s146, 1
    %s148 = scalar_select %p145, %s146, %s147
    %p151 = pneg %p145
    %p152 = scmp.eq.s32.totalorder %s10, 11
    %p153 = por %p151, %p152
    %p154 = scmp.ne.s32.totalorder %s146, %s149
    %p155 = scmp.eq.s32.totalorder %s10, 0
    %p156 = por %p154, %p155
    %p157 = scmp.ne.s32.totalorder %s146, %s149
    %p158 = scmp.eq.s32.totalorder %s15, 11
    %p159 = por %p157, %p158
    %p160 = scmp.ne.s32.totalorder %s149, %s150
    %p161 = scmp.eq.s32.totalorder %s15, 0
    %p162 = por %p160, %p161
    %p163 = scmp.ne.s32.totalorder %s149, %s150
    %p164 = scmp.eq.s32.totalorder %s16, 11
    %p165 = por %p163, %p164
    %p167 = scmp.ne.s32.totalorder %s150, %s166
    %p168 = scmp.eq.s32.totalorder %s16, 0
    %p169 = por %p167, %p168
    %p170 = scmp.le.s32.totalorder 1, %s10
    %p171 = scmp.lt.s32.totalorder %s10, 13
    %p172 = pnand %p170, %p171
    %p173 = pneg %p172
    // Predicated region
    $region9: #{decoder_block.4} parent=5 // pred_check
      _
    $region10: #{decoder_block.4} parent=5 // pred_check_branch
      %175 = sbr.rel (%p172) target = $region12
    $region11: #{decoder_block.4} parent=5 // pred_region
      %s176 = ssub.s32 %s10, 1
      // Predicated region
      $region13: #{decoder_block.4} parent=11 // pred_check
        %p177 = pneg %p55
      $region14: #{decoder_block.4} parent=11 // pred_check_branch
        %179 = sbr.rel (%p177) target = $region16
      $region15: #{decoder_block.4} parent=11 // pred_region
        %s180 = smul.u32 2, %s20
        %p181 = scmp.lt.s32.totalorder %s180, 1
        %s182 = scalar_select %p181, %s180, 1
        %s183 = smul.addr %s182, 8
        %s184 = scalar_lea.vmem %s0, %s183
        %s185 = smul.u32 2, %s20
      $region16: #{decoder_block.4} parent=11 // pred_fallthru
        _
      // Predicated region
      $region17: #{decoder_block.4} parent=11 // pred_check
        %p186 = pneg %p76
      $region18: #{decoder_block.4} parent=11 // pred_check_branch
        %188 = sbr.rel (%p186) target = $region20
      $region19: #{decoder_block.4} parent=11 // pred_region
        _
      $region20: #{decoder_block.4} parent=11 // pred_fallthru
        _
    $region12: #{decoder_block.4} parent=5 // pred_fallthru
      _
    %p189 = scmp.lt.s32.totalorder %s10, 12
    // Predicated region
    $region21: #{decoder_block.4} parent=5 // pred_check
      %p190 = pneg %p189
    $region22: #{decoder_block.4} parent=5 // pred_check_branch
      %192 = sbr.rel (%p190) target = $region24
    $region23: #{decoder_block.4} parent=5 // pred_region
      // Predicated region
      $region25: #{decoder_block.4} parent=23 // pred_check
        %p193 = pneg %p98
      $region26: #{decoder_block.4} parent=23 // pred_check_branch
        %195 = sbr.rel (%p193) target = $region28
      $region27: #{decoder_block.4} parent=23 // pred_region
        %p196 = scmp.lt.s32.totalorder %s18, 2
        %s197 = scalar_select %p196, %s18, 2
        %p198 = scmp.lt.s32.totalorder %s19, 3
        %s199 = scalar_select %p198, %s19, 3
        %s200 = smul.addr %s199, 4
        %s201 = smul.addr %s197, 16
        %s202 = sadd.s32 %s200, %s201
        %s203 = smul.addr %s202, 4
        %s204 = scalar_lea.vmem %s2, %s203
      $region28: #{decoder_block.4} parent=23 // pred_fallthru
        _
      // Predicated region
      $region29: #{decoder_block.4} parent=23 // pred_check
        %p205 = pneg %p126
      $region30: #{decoder_block.4} parent=23 // pred_check_branch
        %207 = sbr.rel (%p205) target = $region32
      $region31: #{decoder_block.4} parent=23 // pred_region
        %p208 = scmp.lt.s32.totalorder %s18, 2
        %s209 = scalar_select %p208, %s18, 2
        %p210 = scmp.lt.s32.totalorder %s19, 3
        %s211 = scalar_select %p210, %s19, 3
        %s212 = smul.addr %s209, 4
        %s213 = sadd.s32 %s211, %s212
        %s214 = scalar_lea.vmem %s3, %s213
      $region32: #{decoder_block.4} parent=23 // pred_fallthru
        _
    $region24: #{decoder_block.4} parent=5 // pred_fallthru
      _
    %p215 = scmp.le.s32.totalorder 1, %s10
    %p216 = scmp.lt.s32.totalorder %s10, 13
    %p217 = pnand %p215, %p216
    %p218 = pneg %p217
    // Predicated region
    $region33: #{decoder_block.4} parent=5 // pred_check
      _
    $region34: #{decoder_block.4} parent=5 // pred_check_branch
      %220 = sbr.rel (%p217) target = $region36
    $region35: #{decoder_block.4} parent=5 // pred_region
      %s221 = ssub.s32 %s10, 1
      %s222 = smul.u32 2, %s20
      %p223 = scmp.lt.s32.totalorder %s222, 1
      %s224 = scalar_select %p223, %s222, 1
      %s225 = smul.addr %s224, 8
      %s226 = scalar_lea.vmem %s0, %s225
      %p227 = pneg %p55
      %p228 = pneg %p52
      %p229 = pneg %p76
      %p230 = pneg %p73
      %p231 = scmp.lt.s32.totalorder %s21, 2
      %s232 = scalar_select %p231, %s21, 2
      %p233 = scmp.lt.s32.totalorder %s22, 3
      %s234 = scalar_select %p233, %s22, 3
      %s235 = smul.addr %s234, 4
      %s236 = smul.addr %s232, 16
      %s237 = sadd.s32 %s235, %s236
      %s238 = smul.addr %s237, 4
      %s239 = scalar_lea.vmem %s2, %s238
      %p240 = pneg %p104
      %p241 = pneg %p101
      %p242 = scmp.lt.s32.totalorder %s21, 2
      %s243 = scalar_select %p242, %s21, 2
      %p244 = scmp.lt.s32.totalorder %s22, 3
      %s245 = scalar_select %p244, %s22, 3
      %s246 = smul.addr %s243, 4
      %s247 = sadd.s32 %s245, %s246
      %s248 = scalar_lea.vmem %s3, %s247
      %p249 = pneg %p132
      %p250 = pneg %p129
      %p251 = pneg %p162
      %p252 = pneg %p159
      %s253 = smul.u32 2, %s20
      %p254 = scmp.lt.s32.totalorder %s21, 2
      %s255 = scalar_select %p254, %s21, 2
      %p256 = scmp.lt.s32.totalorder %s22, 3
      %s257 = scalar_select %p256, %s22, 3
      %p258 = scmp.lt.s32.totalorder %s253, 1
      %s259 = scalar_select %p258, %s253, 1
      %s260 = smul.addr %s257, 2
      %s261 = sadd.s32 %s259, %s260
      %s262 = smul.addr %s255, 8
      %s263 = sadd.s32 %s261, %s262
      %s264 = smul.addr %s263, 4
      %s265 = scalar_lea.vmem %s4, %s264
      %s266 = smul.u32 2, %s20
      %p267 = scmp.lt.s32.totalorder %s266, 1
      %s268 = scalar_select %p267, %s266, 1
      %s269 = smul.addr %s268, 8
      %s270 = scalar_lea.vmem %s0, %s269
      %s271 = smul.u32 2, %s20
      %p272 = scmp.lt.s32.totalorder %s21, 2
      %s273 = scalar_select %p272, %s21, 2
      %p274 = scmp.lt.s32.totalorder %s22, 3
      %s275 = scalar_select %p274, %s22, 3
      %s276 = smul.addr %s275, 4
      %s277 = smul.addr %s273, 16
      %s278 = sadd.s32 %s276, %s277
      %s279 = smul.addr %s278, 4
      %s280 = scalar_lea.vmem %s2, %s279
      %p281 = scmp.lt.s32.totalorder %s21, 2
      %s282 = scalar_select %p281, %s21, 2
      %p283 = scmp.lt.s32.totalorder %s22, 3
      %s284 = scalar_select %p283, %s22, 3
      %s285 = smul.addr %s282, 4
      %s286 = sadd.s32 %s284, %s285
      %s287 = scalar_lea.vmem %s3, %s286
      %s288 = smul.u32 2, %s20
      %p289 = scmp.lt.s32.totalorder %s21, 2
      %s290 = scalar_select %p289, %s21, 2
      %p291 = scmp.lt.s32.totalorder %s22, 3
      %s292 = scalar_select %p291, %s22, 3
      %p293 = scmp.lt.s32.totalorder %s288, 1
      %s294 = scalar_select %p293, %s288, 1
      %s295 = smul.addr %s292, 2
      %s296 = sadd.s32 %s294, %s295
      %s297 = smul.addr %s290, 8
      %s298 = sadd.s32 %s296, %s297
      %s299 = smul.addr %s298, 4
      %s300 = scalar_lea.vmem %s4, %s299
      %s301 = smul.u32 2, %s20
      %p303 = scmp.eq.s32.totalorder %s21, 0
      %p304 = scmp.eq.s32.totalorder %s22, 0
      %p305 = pnand %p303, %p304
      %p306 = pneg %p305
      // Predicated region
      $region37: #{decoder_block.4} parent=35 // pred_check
        _
      $region38: #{decoder_block.4} parent=35 // pred_check_branch
        %308 = sbr.rel (%p305) target = $region40
      $region39: #{decoder_block.4} parent=35 // pred_region
        %v309 = vld [vmem:[%s270] sm:$0xff]
        %v310 = vld [vmem:[%s270 + $0x8] sm:$0xff]
        %v311 = vmul.f32 %v309, %v309
        %v312 = vmul.f32 %v310, %v310
        %vm313 = vcmask 261120
        %v314 = vsel %vm313, %v311, 0.0
        %315 = vadd.xlane.f32.xlu0 %v314
        %v316 = vpop.xlane.xlu0 %315
        %v317 = vsel %vm313, %v312, 0.0
        %318 = vadd.xlane.f32.xlu0 %v317
        %v319 = vpop.xlane.xlu0 %318
        %v320 = vrcp.pop 32.0
        %v321 = vmul.f32 %v316, %v320
        %v322 = vmul.f32 %v319, %v320
        %v323 = vadd.f32 %v321, 1e-06
        %v324 = vadd.f32 %v322, 1e-06
        %v325 = vrsqrt.pop %v323
        %v326 = vrsqrt.pop %v324
        %v327 = vmul.f32 %v309, %v325
        %v328 = vmul.f32 %v310, %v326
        %v329 = vld [vmem:[%s1] sm:$0x1]
        %v331 = vlaneseq
        %v332 = vshrl.u32 %v331, 7
        %v333 = vsub.s32 0, %v332
        %v334 = vrot.slane %v329, %v333
        %v336 = vmul.f32 %v327, %v334
        %v337 = vmul.f32 %v328, %v334
        %v338 = vpack.c.bf16 %v337, %v336
        %v340 = vunpack.c.l.b16 %v338
        %v341 = vunpack.c.h.b16 %v338
        %v342 = vpack.c.b16 %v340, %v340
        %v343 = vpack.c.b16 %v341, %v341
        %vm346 = vcmask 257024
        %347 = vst.msk [vmem:[#allocation2] sm:$0xf] %vm346, %v342
        %348 = vst.msk [vmem:[#allocation2 + $0x4] sm:$0xf] %vm346, %v343
      $region40: #{decoder_block.4} parent=35 // pred_fallthru
        _
      %v349 = vld [vmem:[#allocation2] sm:$0xf]
      %v350 = vld [vmem:[#allocation2 + $0x4] sm:$0xf]
      %v351 = vld [vmem:[%s280] sm:$0xf]
      %v352 = vld [vmem:[%s280 + $0x4] sm:$0xf]
      %v353 = vld [vmem:[%s280 + $0x8] sm:$0xf]
      %v354 = vld [vmem:[%s280 + $0xc] sm:$0xf]
      %v355 = vld [vmem:[%s287] sm:$0x1]
      %v357 = vlaneseq
      %v358 = vshrl.u32 %v357, 7
      %v359 = vsub.s32 0, %v358
      %v360 = vrot.slane %v355, %v359
      %v364 = vunpack.c.l.b16 %v349
      %v365 = vunpack.c.l.b16 %v350
      %v366 = vpack.c.b16 %v365, %v364
      %v371 = vunpack.c.l.b16 %v351
      %v372 = vunpack.c.l.b16 %v352
      %v373 = vunpack.c.l.b16 %v353
      %v374 = vunpack.c.l.b16 %v354
      %v375 = vpack.c.b16 %v372, %v371
      %v376 = vpack.c.b16 %v374, %v373
      %vm379 = vcmask 261120
      %v381 = vsel %vm379, %v366, 0
      %383 = vmatprep.subr.bf16.mxu0 0
      %384 = vmatpush1.bf16.msra.mxu0 0
      %385 = vmatprep.subr.bf16.mxu0 0
      %386 = vmatpush1.bf16.msra.mxu0 0
      %387 = vmatprep.subr.bf16.mxu0 0
      %388 = vmatpush1.bf16.msra.mxu0 0
      %389 = vmatprep.subr.bf16.mxu0 0
      %390 = vmatpush1.bf16.msra.mxu0 0
      %391 = vmatprep.subr.bf16.mxu0 0
      %392 = vmatpush1.bf16.msra.mxu0 0
      %393 = vmatprep.subr.bf16.mxu0 0
      %394 = vmatpush1.bf16.msra.mxu0 0
      %395 = vmatprep.subr.bf16.mxu0 0
      %396 = vmatpush1.bf16.msra.mxu0 %v376
      %397 = vmatprep.subr.bf16.mxu0 0
      %398 = vmatpush1.bf16.msra.mxu0 %v375
      %399 = vmatprep.subr.bf16.mxu0 0
      %400 = vmatpush2.bf16.msra.mxu0 0
      %401 = vmatprep.subr.bf16.mxu0 0
      %402 = vmatpush2.bf16.msra.mxu0 0
      %403 = vmatprep.subr.bf16.mxu0 0
      %404 = vmatpush2.bf16.msra.mxu0 0
      %405 = vmatprep.subr.bf16.mxu0 0
      %406 = vmatpush2.bf16.msra.mxu0 0
      %407 = vmatprep.subr.bf16.mxu0 0
      %408 = vmatpush2.bf16.msra.mxu0 0
      %409 = vmatprep.subr.bf16.mxu0 0
      %410 = vmatpush2.bf16.msra.mxu0 0
      %411 = vmatprep.subr.bf16.mxu0 0
      %412 = vmatpush2.bf16.msra.mxu0 0
      %413 = vmatprep.subr.bf16.mxu0 0
      %414 = vmatpush2.bf16.msra.mxu0 0
      %415 = vmatprep.mubr.bf16.mxu0 0
      %416 = vmatmul.mubr.bf16.gmra.mxu0 %v381
      %v417 = vpop.f32.mrf.mxu0
      %v418 = vadd.f32 %v360, %v417
      %v419 = vpop.f32.mrf.mxu0
      %v420 = vpop.f32.mrf.mxu0
      %v421 = vadd.f32 %v360, %v420
      %v422 = vpop.f32.mrf.mxu0
      %423 = vdwg.mxu0
      %v424 = vpack.c.bf16 %v421, %v418
      %v426 = vunpack.c.l.b16 %v424
      %v427 = vunpack.c.h.b16 %v424
      %v428 = vpack.c.b16 %v426, %v426
      %v429 = vpack.c.b16 %v427, %v427
      %vm432 = vcmask 60416
      %433 = vst.msk [vmem:[%s300] sm:$0xf] %vm432, %v428
      %434 = vst.msk [vmem:[%s300 + $0x4] sm:$0xf] %vm432, %v429
      %s435 = smul.u32 2, %s20
      %p436 = scmp.lt.s32.totalorder %s21, 2
      %s437 = scalar_select %p436, %s21, 2
      %p438 = scmp.lt.s32.totalorder %s22, 3
      %s439 = scalar_select %p438, %s22, 3
      %p440 = scmp.lt.s32.totalorder %s435, 1
      %s441 = scalar_select %p440, %s435, 1
      %s442 = smul.addr %s439, 2
      %s443 = sadd.s32 %s441, %s442
      %s444 = smul.addr %s437, 8
      %s445 = sadd.s32 %s443, %s444
      %s446 = smul.addr %s445, 4
      %s447 = scalar_lea.vmem %s4, %s446
      // Predicated region
      $region41: #{decoder_block.4} parent=35 // pred_check
        %p448 = pneg %p159
      $region42: #{decoder_block.4} parent=35 // pred_check_branch
        %450 = sbr.rel (%p448) target = $region44
      $region43: #{decoder_block.4} parent=35 // pred_region
        %s451 = smul.u32 2, %s20
      $region44: #{decoder_block.4} parent=35 // pred_fallthru
        _
    $region36: #{decoder_block.4} parent=5 // pred_fallthru
      _
    %p452 = scmp.le.s32.totalorder 2, %s10
    // Predicated region
    $region45: #{decoder_block.4} parent=5 // pred_check
      %p453 = pneg %p452
    $region46: #{decoder_block.4} parent=5 // pred_check_branch
      %455 = sbr.rel (%p453) target = $region48
    $region47: #{decoder_block.4} parent=5 // pred_region
      %s456 = ssub.s32 %s10, 2
      // Predicated region
      $region49: #{decoder_block.4} parent=47 // pred_check
        %p457 = pneg %p165
      $region50: #{decoder_block.4} parent=47 // pred_check_branch
        %459 = sbr.rel (%p457) target = $region52
      $region51: #{decoder_block.4} parent=47 // pred_region
        %s460 = smul.u32 2, %s23
        %p461 = scmp.lt.s32.totalorder %s24, 2
        %s462 = scalar_select %p461, %s24, 2
        %p463 = scmp.lt.s32.totalorder %s25, 3
        %s464 = scalar_select %p463, %s25, 3
        %p465 = scmp.lt.s32.totalorder %s460, 1
        %s466 = scalar_select %p465, %s460, 1
        %s467 = smul.addr %s464, 2
        %s468 = sadd.s32 %s466, %s467
        %s469 = smul.addr %s462, 8
        %s470 = sadd.s32 %s468, %s469
        %s471 = smul.addr %s470, 4
        %s472 = scalar_lea.vmem %s4, %s471
      $region52: #{decoder_block.4} parent=47 // pred_fallthru
        _
    $region48: #{decoder_block.4} parent=5 // pred_fallthru
      _
  $region6: #{decoder_block.4} parent=0 // loop_footer
    %s14 = sadd.s32 1, %s10
  $region7: #{decoder_block.4} parent=0 // loop_footer_branch
    %9 = sbr.rel target = $region3
  $region8: #{decoder_block.4} parent=0 // loop_exit
    _

// kernel: decoder_block.6
$region0: #{decoder_block.6}
  #allocation0 [shape = 'u32[]', space=smem, size = 0x4, offset = 0x4, fixed_abs, tag = 'smem constant byte address 0x4 - core index']
  #allocation1 [shape = 'u32[144,128]{1,0:T(1,128)}', space=vmem, size = 0x12000, scoped, tag = 'internal scratch']
  %s0 = inlined_call_operand.vmem [shape: bf16[4,16,8], index: 0, kind: input, shape index: {}]
  %s1 = inlined_call_operand.vmem [shape: bf16[4,8,32], index: 1, kind: input, shape index: {}]
  %s2 = inlined_call_operand.vmem [shape: f32[1,32], index: 2, kind: input, shape index: {}]
  %s3 = inlined_call_operand.vmem [shape: f32[16,32], index: 3, kind: input, shape index: {}]
  %s4 = inlined_call_operand.vmem [shape: f32[16,32], index: 4, kind: output, shape index: {}]
  %s5 = sld [smem:[#allocation0]]
  $region53: #{decoder_block.6} parent=0
    _
  %s7 = ssub.s32 1, %s5
  %s8 = scalar_select 0, %s7, %s5
  loop: start=0, step=1, limit=6
  $region2: #{decoder_block.6} parent=0 // loop_pre_header
    _
  $region3: #{decoder_block.6} parent=0 // loop_header
    %s10 = sphi 0, %s14
    %p11 = scmp.ge.s32.totalorder %s10, 6
    %s17 = sphi 0, %s36
    %s18 = sphi 0, %s32
    %s19 = sphi 0, %s28
    %s20 = sphi 0, %s17
    %s21 = sphi 0, %s18
    %s22 = sphi 0, %s19
    %s23 = sphi 0, %s20
    %s24 = sphi 0, %s21
    %s25 = sphi 0, %s22
    %s41 = sphi 0, %s43
    %s44 = sphi 0, %s41
    %s45 = sphi 0, %s44
    %s61 = sphi 0, %s45
    %s69 = sphi 0, %s71
    %s72 = sphi 0, %s69
    %s73 = sphi 0, %s72
    %s89 = sphi 0, %s73
    %s95 = sphi 0, %s97
    %s98 = sphi 0, %s95
    %s99 = sphi 0, %s98
    %s115 = sphi 0, %s99
    %s123 = sphi 0, %s125
    %s126 = sphi 0, %s123
    %s127 = sphi 0, %s126
    %s143 = sphi 0, %s127
    %s151 = sphi 0, %s153
    %s154 = sphi 0, %s151
    %s155 = sphi 0, %s154
    %s171 = sphi 0, %s155
  $region4: #{decoder_block.6} parent=0 // loop_header_branch
    %13 = sbr.rel (%p11) target = $region8
  $region5: #{decoder_block.6} parent=0 // loop_body
    %s15 = ssub.s32 %s10, 1
    %s16 = ssub.s32 %s10, 2
    %s26 = sadd.s32 1, %s19
    %p27 = scmp.ge.s32.totalorder %s26, 4
    %s28 = scalar_select %p27, 0, %s26
    %s29 = sadd.s32 1, %s18
    %s30 = scalar_select %p27, %s29, %s18
    %p31 = scmp.ge.s32.totalorder %s30, 1
    %s32 = scalar_select %p31, 0, %s30
    %s33 = sadd.s32 1, %s17
    %s34 = scalar_select %p31, %s33, %s17
    %p35 = scmp.ge.s32.totalorder %s34, 1
    %s36 = scalar_select %p35, 0, %s34
    %s37 = ssub.s32 %s19, %s28
    %s38 = ssub.s32 %s17, %s36
    %s39 = sor.u32 %s37, %s38
    %p40 = scmp.eq.s32.totalorder %s39, 0
    %s42 = sadd.s32 %s41, 1
    %s43 = scalar_select %p40, %s41, %s42
    %p46 = pneg %p40
    %p47 = scmp.eq.s32.totalorder %s10, 3
    %p48 = por %p46, %p47
    %p49 = scmp.ne.s32.totalorder %s41, %s44
    %p50 = scmp.eq.s32.totalorder %s10, 0
    %p51 = por %p49, %p50
    %p52 = scmp.ne.s32.totalorder %s41, %s44
    %p53 = scmp.eq.s32.totalorder %s15, 3
    %p54 = por %p52, %p53
    %p55 = scmp.ne.s32.totalorder %s44, %s45
    %p56 = scmp.eq.s32.totalorder %s15, 0
    %p57 = por %p55, %p56
    %p58 = scmp.ne.s32.totalorder %s44, %s45
    %p59 = scmp.eq.s32.totalorder %s16, 3
    %p60 = por %p58, %p59
    %p62 = scmp.ne.s32.totalorder %s45, %s61
    %p63 = scmp.eq.s32.totalorder %s16, 0
    %p64 = por %p62, %p63
    %s65 = ssub.s32 %s19, %s28
    %s66 = ssub.s32 %s18, %s32
    %s67 = sor.u32 %s65, %s66
    %p68 = scmp.eq.s32.totalorder %s67, 0
    %s70 = sadd.s32 %s69, 1
    %s71 = scalar_select %p68, %s69, %s70
    %p74 = pneg %p68
    %p75 = scmp.eq.s32.totalorder %s10, 3
    %p76 = por %p74, %p75
    %p77 = scmp.ne.s32.totalorder %s69, %s72
    %p78 = scmp.eq.s32.totalorder %s10, 0
    %p79 = por %p77, %p78
    %p80 = scmp.ne.s32.totalorder %s69, %s72
    %p81 = scmp.eq.s32.totalorder %s15, 3
    %p82 = por %p80, %p81
    %p83 = scmp.ne.s32.totalorder %s72, %s73
    %p84 = scmp.eq.s32.totalorder %s15, 0
    %p85 = por %p83, %p84
    %p86 = scmp.ne.s32.totalorder %s72, %s73
    %p87 = scmp.eq.s32.totalorder %s16, 3
    %p88 = por %p86, %p87
    %p90 = scmp.ne.s32.totalorder %s73, %s89
    %p91 = scmp.eq.s32.totalorder %s16, 0
    %p92 = por %p90, %p91
    %s93 = ssub.s32 %s18, %s32
    %p94 = scmp.eq.s32.totalorder %s93, 0
    %s96 = sadd.s32 %s95, 1
    %s97 = scalar_select %p94, %s95, %s96
    %p100 = pneg %p94
    %p101 = scmp.eq.s32.totalorder %s10, 3
    %p102 = por %p100, %p101
    %p103 = scmp.ne.s32.totalorder %s95, %s98
    %p104 = scmp.eq.s32.totalorder %s10, 0
    %p105 = por %p103, %p104
    %p106 = scmp.ne.s32.totalorder %s95, %s98
    %p107 = scmp.eq.s32.totalorder %s15, 3
    %p108 = por %p106, %p107
    %p109 = scmp.ne.s32.totalorder %s98, %s99
    %p110 = scmp.eq.s32.totalorder %s15, 0
    %p111 = por %p109, %p110
    %p112 = scmp.ne.s32.totalorder %s98, %s99
    %p113 = scmp.eq.s32.totalorder %s16, 3
    %p114 = por %p112, %p113
    %p116 = scmp.ne.s32.totalorder %s99, %s115
    %p117 = scmp.eq.s32.totalorder %s16, 0
    %p118 = por %p116, %p117
    %s119 = ssub.s32 %s17, %s36
    %s120 = ssub.s32 %s18, %s32
    %s121 = sor.u32 %s119, %s120
    %p122 = scmp.eq.s32.totalorder %s121, 0
    %s124 = sadd.s32 %s123, 1
    %s125 = scalar_select %p122, %s123, %s124
    %p128 = pneg %p122
    %p129 = scmp.eq.s32.totalorder %s10, 3
    %p130 = por %p128, %p129
    %p131 = scmp.ne.s32.totalorder %s123, %s126
    %p132 = scmp.eq.s32.totalorder %s10, 0
    %p133 = por %p131, %p132
    %p134 = scmp.ne.s32.totalorder %s123, %s126
    %p135 = scmp.eq.s32.totalorder %s15, 3
    %p136 = por %p134, %p135
    %p137 = scmp.ne.s32.totalorder %s126, %s127
    %p138 = scmp.eq.s32.totalorder %s15, 0
    %p139 = por %p137, %p138
    %p140 = scmp.ne.s32.totalorder %s126, %s127
    %p141 = scmp.eq.s32.totalorder %s16, 3
    %p142 = por %p140, %p141
    %p144 = scmp.ne.s32.totalorder %s127, %s143
    %p145 = scmp.eq.s32.totalorder %s16, 0
    %p146 = por %p144, %p145
    %s147 = ssub.s32 %s17, %s36
    %s148 = ssub.s32 %s18, %s32
    %s149 = sor.u32 %s147, %s148
    %p150 = scmp.eq.s32.totalorder %s149, 0
    %s152 = sadd.s32 %s151, 1
    %s153 = scalar_select %p150, %s151, %s152
    %p156 = pneg %p150
    %p157 = scmp.eq.s32.totalorder %s10, 3
    %p158 = por %p156, %p157
    %p159 = scmp.ne.s32.totalorder %s151, %s154
    %p160 = scmp.eq.s32.totalorder %s10, 0
    %p161 = por %p159, %p160
    %p162 = scmp.ne.s32.totalorder %s151, %s154
    %p163 = scmp.eq.s32.totalorder %s15, 3
    %p164 = por %p162, %p163
    %p165 = scmp.ne.s32.totalorder %s154, %s155
    %p166 = scmp.eq.s32.totalorder %s15, 0
    %p167 = por %p165, %p166
    %p168 = scmp.ne.s32.totalorder %s154, %s155
    %p169 = scmp.eq.s32.totalorder %s16, 3
    %p170 = por %p168, %p169
    %p172 = scmp.ne.s32.totalorder %s155, %s171
    %p173 = scmp.eq.s32.totalorder %s16, 0
    %p174 = por %p172, %p173
    %p175 = scmp.le.s32.totalorder 1, %s10
    %p176 = scmp.lt.s32.totalorder %s10, 5
    %p177 = pnand %p175, %p176
    %p178 = pneg %p177
    // Predicated region
    $region9: #{decoder_block.6} parent=5 // pred_check
      _
    $region10: #{decoder_block.6} parent=5 // pred_check_branch
      %180 = sbr.rel (%p177) target = $region12
    $region11: #{decoder_block.6} parent=5 // pred_region
      %s181 = ssub.s32 %s10, 1
      // Predicated region
      $region13: #{decoder_block.6} parent=11 // pred_check
        %p182 = pneg %p111
      $region14: #{decoder_block.6} parent=11 // pred_check_branch
        %184 = sbr.rel (%p182) target = $region16
      $region15: #{decoder_block.6} parent=11 // pred_region
        %p185 = scmp.lt.s32.totalorder %s21, 0
        %s186 = scalar_select %p185, %s21, 0
        %s187 = scalar_lea.vmem %s2, %s186
      $region16: #{decoder_block.6} parent=11 // pred_fallthru
        _
      // Predicated region
      $region17: #{decoder_block.6} parent=11 // pred_check
        %p188 = pneg %p139
      $region18: #{decoder_block.6} parent=11 // pred_check_branch
        %190 = sbr.rel (%p188) target = $region20
      $region19: #{decoder_block.6} parent=11 // pred_region
        %s191 = smul.u32 2, %s20
        %p192 = scmp.lt.s32.totalorder %s191, 1
        %s193 = scalar_select %p192, %s191, 1
        %p194 = scmp.lt.s32.totalorder %s21, 0
        %s195 = scalar_select %p194, %s21, 0
        %s196 = sadd.s32 %s195, %s193
        %s197 = smul.addr %s196, 8
        %s198 = scalar_lea.vmem %s3, %s197
        %s199 = smul.u32 2, %s20
      $region20: #{decoder_block.6} parent=11 // pred_fallthru
        _
    $region12: #{decoder_block.6} parent=5 // pred_fallthru
      _
    %p200 = scmp.lt.s32.totalorder %s10, 4
    // Predicated region
    $region21: #{decoder_block.6} parent=5 // pred_check
      %p201 = pneg %p200
    $region22: #{decoder_block.6} parent=5 // pred_check_branch
      %203 = sbr.rel (%p201) target = $region24
    $region23: #{decoder_block.6} parent=5 // pred_region
      // Predicated region
      $region25: #{decoder_block.6} parent=23 // pred_check
        %p204 = pneg %p51
      $region26: #{decoder_block.6} parent=23 // pred_check_branch
        %206 = sbr.rel (%p204) target = $region28
      $region27: #{decoder_block.6} parent=23 // pred_region
        %s207 = smul.u32 2, %s17
        %p208 = scmp.lt.s32.totalorder %s19, 3
        %s209 = scalar_select %p208, %s19, 3
        %p210 = scmp.lt.s32.totalorder %s207, 1
        %s211 = scalar_select %p210, %s207, 1
        %s212 = smul.addr %s209, 2
        %s213 = sadd.s32 %s211, %s212
        %s214 = smul.addr %s213, 4
        %s215 = scalar_lea.vmem %s0, %s214
        %s216 = smul.u32 2, %s17
      $region28: #{decoder_block.6} parent=23 // pred_fallthru
        _
      // Predicated region
      $region29: #{decoder_block.6} parent=23 // pred_check
        %p217 = pneg %p79
      $region30: #{decoder_block.6} parent=23 // pred_check_branch
        %219 = sbr.rel (%p217) target = $region32
      $region31: #{decoder_block.6} parent=23 // pred_region
        %p220 = scmp.lt.s32.totalorder %s19, 3
        %s221 = scalar_select %p220, %s19, 3
        %p222 = scmp.lt.s32.totalorder %s18, 0
        %s223 = scalar_select %p222, %s18, 0
        %s224 = sadd.s32 %s223, %s221
        %s225 = smul.addr %s224, 4
        %s226 = scalar_lea.vmem %s1, %s225
      $region32: #{decoder_block.6} parent=23 // pred_fallthru
        _
    $region24: #{decoder_block.6} parent=5 // pred_fallthru
      _
    %p227 = scmp.le.s32.totalorder 1, %s10
    %p228 = scmp.lt.s32.totalorder %s10, 5
    %p229 = pnand %p227, %p228
    %p230 = pneg %p229
    // Predicated region
    $region33: #{decoder_block.6} parent=5 // pred_check
      _
    $region34: #{decoder_block.6} parent=5 // pred_check_branch
      %232 = sbr.rel (%p229) target = $region36
    $region35: #{decoder_block.6} parent=5 // pred_region
      %s233 = ssub.s32 %s10, 1
      %s234 = smul.u32 2, %s20
      %p235 = scmp.lt.s32.totalorder %s22, 3
      %s236 = scalar_select %p235, %s22, 3
      %p237 = scmp.lt.s32.totalorder %s234, 1
      %s238 = scalar_select %p237, %s234, 1
      %s239 = smul.addr %s236, 2
      %s240 = sadd.s32 %s238, %s239
      %s241 = smul.addr %s240, 4
      %s242 = scalar_lea.vmem %s0, %s241
      %p243 = pneg %p57
      %p244 = pneg %p54
      %p245 = scmp.lt.s32.totalorder %s22, 3
      %s246 = scalar_select %p245, %s22, 3
      %p247 = scmp.lt.s32.totalorder %s21, 0
      %s248 = scalar_select %p247, %s21, 0
      %s249 = sadd.s32 %s248, %s246
      %s250 = smul.addr %s249, 4
      %s251 = scalar_lea.vmem %s1, %s250
      %p252 = pneg %p85
      %p253 = pneg %p82
      %p254 = scmp.lt.s32.totalorder %s21, 0
      %s255 = scalar_select %p254, %s21, 0
      %s256 = scalar_lea.vmem %s2, %s255
      %p257 = pneg %p111
      %p258 = pneg %p108
      %s259 = smul.u32 2, %s20
      %p260 = scmp.lt.s32.totalorder %s259, 1
      %s261 = scalar_select %p260, %s259, 1
      %p262 = scmp.lt.s32.totalorder %s21, 0
      %s263 = scalar_select %p262, %s21, 0
      %s264 = sadd.s32 %s263, %s261
      %s265 = smul.addr %s264, 8
      %s266 = scalar_lea.vmem %s3, %s265
      %p267 = pneg %p139
      %p268 = pneg %p136
      %p269 = pneg %p167
      %p270 = pneg %p164
      %s271 = smul.u32 2, %s20
      %p272 = scmp.lt.s32.totalorder %s271, 1
      %s273 = scalar_select %p272, %s271, 1
      %p274 = scmp.lt.s32.totalorder %s21, 0
      %s275 = scalar_select %p274, %s21, 0
      %s276 = sadd.s32 %s275, %s273
      %s277 = smul.addr %s276, 8
      %s278 = scalar_lea.vmem %s4, %s277
      %s279 = smul.u32 2, %s20
      %p280 = scmp.lt.s32.totalorder %s22, 3
      %s281 = scalar_select %p280, %s22, 3
      %p282 = scmp.lt.s32.totalorder %s279, 1
      %s283 = scalar_select %p282, %s279, 1
      %s284 = smul.addr %s281, 2
      %s285 = sadd.s32 %s283, %s284
      %s286 = smul.addr %s285, 4
      %s287 = scalar_lea.vmem %s0, %s286
      %s288 = smul.u32 2, %s20
      %p289 = scmp.lt.s32.totalorder %s22, 3
      %s290 = scalar_select %p289, %s22, 3
      %p291 = scmp.lt.s32.totalorder %s21, 0
      %s292 = scalar_select %p291, %s21, 0
      %s293 = sadd.s32 %s292, %s290
      %s294 = smul.addr %s293, 4
      %s295 = scalar_lea.vmem %s1, %s294
      %p296 = scmp.lt.s32.totalorder %s21, 0
      %s297 = scalar_select %p296, %s21, 0
      %s298 = scalar_lea.vmem %s2, %s297
      %s299 = smul.u32 2, %s20
      %p300 = scmp.lt.s32.totalorder %s299, 1
      %s301 = scalar_select %p300, %s299, 1
      %p302 = scmp.lt.s32.totalorder %s21, 0
      %s303 = scalar_select %p302, %s21, 0
      %s304 = sadd.s32 %s303, %s301
      %s305 = smul.addr %s304, 8
      %s306 = scalar_lea.vmem %s3, %s305
      %s307 = smul.u32 2, %s20
      %s308 = smul.u32 2, %s20
      %p309 = scmp.lt.s32.totalorder %s308, 1
      %s310 = scalar_select %p309, %s308, 1
      %p311 = scmp.lt.s32.totalorder %s21, 0
      %s312 = scalar_select %p311, %s21, 0
      %s313 = sadd.s32 %s312, %s310
      %s314 = smul.addr %s313, 8
      %s315 = scalar_lea.vmem %s4, %s314
      %s316 = smul.u32 2, %s20
      %p318 = scmp.eq.s32.totalorder %s22, 0
      // Predicated region
      $region37: #{decoder_block.6} parent=35 // pred_check
        %p319 = pneg %p318
      $region38: #{decoder_block.6} parent=35 // pred_check_branch
        %321 = sbr.rel (%p319) target = $region40
      $region39: #{decoder_block.6} parent=35 // pred_region
        %v322 = vld [vmem:[%s306] sm:$0xff]
        %v323 = vld [vmem:[%s306 + $0x8] sm:$0xff]
        %v324 = vld [vmem:[%s298] sm:$0x1]
        %v326 = vlaneseq
        %v327 = vshrl.u32 %v326, 7
        %v328 = vsub.s32 0, %v327
        %v329 = vrot.slane %v324, %v328
        %v331 = vadd.f32 %v322, %v329
        %v332 = vadd.f32 %v323, %v329
        %vm333 = vcmask 261120
        %334 = vst.msk [vmem:[%s315] sm:$0xff] %vm333, %v331
        %335 = vst.msk [vmem:[%s315 + $0x8] sm:$0xff] %vm333, %v332
      $region40: #{decoder_block.6} parent=35 // pred_fallthru
        _
      %v336 = vld [vmem:[%s315] sm:$0xff]
      %v337 = vld [vmem:[%s315 + $0x8] sm:$0xff]
      %v338 = vld [vmem:[%s287] sm:$0xf]
      %v339 = vld [vmem:[%s287 + $0x4] sm:$0xf]
      %v340 = vld [vmem:[%s295] sm:$0xf]
      %v343 = vunpack.c.l.b16 %v338
      %v344 = vunpack.c.l.b16 %v339
      %v345 = vpack.c.b16 %v344, %v343
      %vm346 = vcmask 64512
      %v348 = vsel %vm346, %v345, 0
      %vm350 = vcmask 1043456
      %v352 = vsel %vm350, %v340, 0
      %354 = vmatprep.subr.bf16.mxu0 0
      %355 = vmatpush1.bf16.msra.mxu0 0
      %356 = vmatprep.subr.bf16.mxu0 0
      %357 = vmatpush1.bf16.msra.mxu0 0
      %358 = vmatprep.subr.bf16.mxu0 0
      %359 = vmatpush1.bf16.msra.mxu0 0
      %360 = vmatprep.subr.bf16.mxu0 0
      %361 = vmatpush1.bf16.msra.mxu0 0
      %362 = vmatprep.subr.bf16.mxu0 0
      %363 = vmatpush1.bf16.msra.mxu0 0
      %364 = vmatprep.subr.bf16.mxu0 0
      %365 = vmatpush1.bf16.msra.mxu0 0
      %366 = vmatprep.subr.bf16.mxu0 0
      %367 = vmatpush1.bf16.msra.mxu0 0
      %368 = vmatprep.subr.bf16.mxu0 0
      %369 = vmatpush1.bf16.msra.mxu0 %v352
      %370 = vmatprep.subr.bf16.mxu0 0
      %371 = vmatpush2.bf16.msra.mxu0 0
      %372 = vmatprep.subr.bf16.mxu0 0
      %373 = vmatpush2.bf16.msra.mxu0 0
      %374 = vmatprep.subr.bf16.mxu0 0
      %375 = vmatpush2.bf16.msra.mxu0 0
      %376 = vmatprep.subr.bf16.mxu0 0
      %377 = vmatpush2.bf16.msra.mxu0 0
      %378 = vmatprep.subr.bf16.mxu0 0
      %379 = vmatpush2.bf16.msra.mxu0 0
      %380 = vmatprep.subr.bf16.mxu0 0
      %381 = vmatpush2.bf16.msra.mxu0 0
      %382 = vmatprep.subr.bf16.mxu0 0
      %383 = vmatpush2.bf16.msra.mxu0 0
      %384 = vmatprep.subr.bf16.mxu0 0
      %385 = vmatpush2.bf16.msra.mxu0 0
      %386 = vmatprep.mubr.bf16.mxu0 0
      %387 = vmatmul.mubr.bf16.gmra.mxu0 %v348
      %v388 = vpop.f32.mrf.mxu0
      %v389 = vadd.f32 0.0, %v388
      %v390 = vpop.f32.mrf.mxu0
      %v391 = vpop.f32.mrf.mxu0
      %v392 = vadd.f32 0.0, %v391
      %v393 = vpop.f32.mrf.mxu0
      %394 = vdwg.mxu0
      %v395 = vadd.f32 %v336, %v389
      %v396 = vadd.f32 %v337, %v392
      %vm397 = vcmask 261120
      %398 = vst.msk [vmem:[%s315] sm:$0xff] %vm397, %v395
      %399 = vst.msk [vmem:[%s315 + $0x8] sm:$0xff] %vm397, %v396
      %s400 = smul.u32 2, %s20
      %p401 = scmp.lt.s32.totalorder %s400, 1
      %s402 = scalar_select %p401, %s400, 1
      %p403 = scmp.lt.s32.totalorder %s21, 0
      %s404 = scalar_select %p403, %s21, 0
      %s405 = sadd.s32 %s404, %s402
      %s406 = smul.addr %s405, 8
      %s407 = scalar_lea.vmem %s4, %s406
      // Predicated region
      $region41: #{decoder_block.6} parent=35 // pred_check
        %p408 = pneg %p164
      $region42: #{decoder_block.6} parent=35 // pred_check_branch
        %410 = sbr.rel (%p408) target = $region44
      $region43: #{decoder_block.6} parent=35 // pred_region
        %s411 = smul.u32 2, %s20
      $region44: #{decoder_block.6} parent=35 // pred_fallthru
        _
      // Predicated region
      $region45: #{decoder_block.6} parent=35 // pred_check
        %p412 = pneg %p164
      $region46: #{decoder_block.6} parent=35 // pred_check_branch
        %414 = sbr.rel (%p412) target = $region48
      $region47: #{decoder_block.6} parent=35 // pred_region
        %s415 = smul.u32 2, %s20
        %p416 = scmp.lt.s32.totalorder %s415, 1
        %s417 = scalar_select %p416, %s415, 1
        %p418 = scmp.lt.s32.totalorder %s21, 0
        %s419 = scalar_select %p418, %s21, 0
        %s420 = sadd.s32 %s419, %s417
        %s421 = smul.addr %s420, 8
        %s422 = scalar_lea.vmem %s4, %s421
      $region48: #{decoder_block.6} parent=35 // pred_fallthru
        _
    $region36: #{decoder_block.6} parent=5 // pred_fallthru
      _
    %p423 = scmp.le.s32.totalorder 2, %s10
    // Predicated region
    $region49: #{decoder_block.6} parent=5 // pred_check
      %p424 = pneg %p423
    $region50: #{decoder_block.6} parent=5 // pred_check_branch
      %426 = sbr.rel (%p424) target = $region52
    $region51: #{decoder_block.6} parent=5 // pred_region
      %s427 = ssub.s32 %s10, 2
    $region52: #{decoder_block.6} parent=5 // pred_fallthru
      _
  $region6: #{decoder_block.6} parent=0 // loop_footer
    %s14 = sadd.s32 1, %s10
  $region7: #{decoder_block.6} parent=0 // loop_footer_branch
    %9 = sbr.rel target = $region3
  $region8: #{decoder_block.6} parent=0 // loop_exit
    _

// kernel: decoder_block.5
$region0: #{decoder_block.5}
  #allocation0 [shape = 'u32[]', space=smem, size = 0x4, offset = 0x4, fixed_abs, tag = 'smem constant byte address 0x4 - core index']
  #allocation1 [shape = 'u32[144,128]{1,0:T(1,128)}', space=vmem, size = 0x12000, scoped, tag = 'internal scratch']
  #allocation2 [shape = 'f32[8,1]{1,0:T(8,128)}', space=vmem, size = 0x1000, scoped, tag = 'scratch operand']
  #allocation3 [shape = 'f32[8,1]{1,0:T(8,128)}', space=vmem, size = 0x1000, scoped, tag = 'scratch operand']
  #allocation4 [shape = 'f32[8,8]{1,0:T(8,128)}', space=vmem, size = 0x1000, scoped, tag = 'scratch operand']
  %s0 = inlined_call_operand.vmem [shape: bf16[3,4,2,8,8], index: 0, kind: input, shape index: {}, may-alias: {0,1,2}]
  %s1 = inlined_call_operand.vmem [shape: bf16[3,4,2,8,8], index: 1, kind: input, shape index: {}, may-alias: {0,1,2}]
  %s2 = inlined_call_operand.vmem [shape: bf16[3,4,2,8,8], index: 2, kind: input, shape index: {}, may-alias: {0,1,2}]
  %s3 = inlined_call_operand.vmem [shape: f32[8,8], index: 3, kind: input, shape index: {}, may-alias: {3,5}]
  %s4 = inlined_call_operand.vmem [shape: f32[8,8], index: 4, kind: input, shape index: {}, may-alias: {4,6}]
  %s5 = inlined_call_operand.vmem [shape: f32[8,8], index: 5, kind: input, shape index: {}, may-alias: {3,5}]
  %s6 = inlined_call_operand.vmem [shape: f32[8,8], index: 6, kind: input, shape index: {}, may-alias: {4,6}]
  %s7 = inlined_call_operand.vmem [shape: bf16[4,2,8,8], index: 7, kind: output, shape index: {}]
  %s8 = sld [smem:[#allocation0]]
  $region77: #{decoder_block.5} parent=0
    _
  %s10 = ssub.s32 1, %s8
  %s11 = scalar_select 0, %s10, %s8
  loop: start=0, step=1, limit=10
  $region2: #{decoder_block.5} parent=0 // loop_pre_header
    _
  $region3: #{decoder_block.5} parent=0 // loop_header
    %s13 = sphi 0, %s17
    %p14 = scmp.ge.s32.totalorder %s13, 10
    %s20 = sphi 0, %s46
    %s21 = sphi 0, %s42
    %s22 = sphi 0, %s38
    %s23 = sphi 0, %s34
    %s24 = sphi 0, %s20
    %s25 = sphi 0, %s21
    %s26 = sphi 0, %s22
    %s27 = sphi 0, %s23
    %s28 = sphi 0, %s24
    %s29 = sphi 0, %s25
    %s30 = sphi 0, %s26
    %s31 = sphi 0, %s27
    %s53 = sphi 0, %s55
    %s56 = sphi 0, %s53
    %s57 = sphi 0, %s56
    %s73 = sphi 0, %s57
    %s83 = sphi 0, %s85
    %s86 = sphi 0, %s83
    %s87 = sphi 0, %s86
    %s103 = sphi 0, %s87
    %s113 = sphi 0, %s115
    %s116 = sphi 0, %s113
    %s117 = sphi 0, %s116
    %s133 = sphi 0, %s117
    %s139 = sphi 0, %s141
    %s142 = sphi 0, %s139
    %s143 = sphi 0, %s142
    %s159 = sphi 0, %s143
    %s165 = sphi 0, %s167
    %s168 = sphi 0, %s165
    %s169 = sphi 0, %s168
    %s185 = sphi 0, %s169
    %s191 = sphi 0, %s193
    %s194 = sphi 0, %s191
    %s195 = sphi 0, %s194
    %s211 = sphi 0, %s195
    %s217 = sphi 0, %s219
    %s220 = sphi 0, %s217
    %s221 = sphi 0, %s220
    %s237 = sphi 0, %s221
    %s247 = sphi 0, %s249
    %s250 = sphi 0, %s247
    %s251 = sphi 0, %s250
    %s267 = sphi 0, %s251
  $region4: #{decoder_block.5} parent=0 // loop_header_branch
    %16 = sbr.rel (%p14) target = $region8
  $region5: #{decoder_block.5} parent=0 // loop_body
    %s18 = ssub.s32 %s13, 1
    %s19 = ssub.s32 %s13, 2
    %s32 = sadd.s32 1, %s23
    %p33 = scmp.ge.s32.totalorder %s32, 1
    %s34 = scalar_select %p33, 0, %s32
    %s35 = sadd.s32 1, %s22
    %s36 = scalar_select %p33, %s35, %s22
    %p37 = scmp.ge.s32.totalorder %s36, 1
    %s38 = scalar_select %p37, 0, %s36
    %s39 = sadd.s32 1, %s21
    %s40 = scalar_select %p37, %s39, %s21
    %p41 = scmp.ge.s32.totalorder %s40, 4
    %s42 = scalar_select %p41, 0, %s40
    %s43 = sadd.s32 1, %s20
    %s44 = scalar_select %p41, %s43, %s20
    %p45 = scmp.ge.s32.totalorder %s44, 2
    %s46 = scalar_select %p45, 0, %s44
    %s47 = ssub.s32 %s21, %s42
    %s48 = ssub.s32 %s20, %s46
    %s49 = sor.u32 %s47, %s48
    %s50 = ssub.s32 %s22, %s38
    %s51 = sor.u32 %s49, %s50
    %p52 = scmp.eq.s32.totalorder %s51, 0
    %s54 = sadd.s32 %s53, 1
    %s55 = scalar_select %p52, %s53, %s54
    %p58 = pneg %p52
    %p59 = scmp.eq.s32.totalorder %s13, 7
    %p60 = por %p58, %p59
    %p61 = scmp.ne.s32.totalorder %s53, %s56
    %p62 = scmp.eq.s32.totalorder %s13, 0
    %p63 = por %p61, %p62
    %p64 = scmp.ne.s32.totalorder %s53, %s56
    %p65 = scmp.eq.s32.totalorder %s18, 7
    %p66 = por %p64, %p65
    %p67 = scmp.ne.s32.totalorder %s56, %s57
    %p68 = scmp.eq.s32.totalorder %s18, 0
    %p69 = por %p67, %p68
    %p70 = scmp.ne.s32.totalorder %s56, %s57
    %p71 = scmp.eq.s32.totalorder %s19, 7
    %p72 = por %p70, %p71
    %p74 = scmp.ne.s32.totalorder %s57, %s73
    %p75 = scmp.eq.s32.totalorder %s19, 0
    %p76 = por %p74, %p75
    %s77 = ssub.s32 %s21, %s42
    %s78 = ssub.s32 %s20, %s46
    %s79 = sor.u32 %s77, %s78
    %s80 = ssub.s32 %s23, %s34
    %s81 = sor.u32 %s79, %s80
    %p82 = scmp.eq.s32.totalorder %s81, 0
    %s84 = sadd.s32 %s83, 1
    %s85 = scalar_select %p82, %s83, %s84
    %p88 = pneg %p82
    %p89 = scmp.eq.s32.totalorder %s13, 7
    %p90 = por %p88, %p89
    %p91 = scmp.ne.s32.totalorder %s83, %s86
    %p92 = scmp.eq.s32.totalorder %s13, 0
    %p93 = por %p91, %p92
    %p94 = scmp.ne.s32.totalorder %s83, %s86
    %p95 = scmp.eq.s32.totalorder %s18, 7
    %p96 = por %p94, %p95
    %p97 = scmp.ne.s32.totalorder %s86, %s87
    %p98 = scmp.eq.s32.totalorder %s18, 0
    %p99 = por %p97, %p98
    %p100 = scmp.ne.s32.totalorder %s86, %s87
    %p101 = scmp.eq.s32.totalorder %s19, 7
    %p102 = por %p100, %p101
    %p104 = scmp.ne.s32.totalorder %s87, %s103
    %p105 = scmp.eq.s32.totalorder %s19, 0
    %p106 = por %p104, %p105
    %s107 = ssub.s32 %s21, %s42
    %s108 = ssub.s32 %s20, %s46
    %s109 = sor.u32 %s107, %s108
    %s110 = ssub.s32 %s23, %s34
    %s111 = sor.u32 %s109, %s110
    %p112 = scmp.eq.s32.totalorder %s111, 0
    %s114 = sadd.s32 %s113, 1
    %s115 = scalar_select %p112, %s113, %s114
    %p118 = pneg %p112
    %p119 = scmp.eq.s32.totalorder %s13, 7
    %p120 = por %p118, %p119
    %p121 = scmp.ne.s32.totalorder %s113, %s116
    %p122 = scmp.eq.s32.totalorder %s13, 0
    %p123 = por %p121, %p122
    %p124 = scmp.ne.s32.totalorder %s113, %s116
    %p125 = scmp.eq.s32.totalorder %s18, 7
    %p126 = por %p124, %p125
    %p127 = scmp.ne.s32.totalorder %s116, %s117
    %p128 = scmp.eq.s32.totalorder %s18, 0
    %p129 = por %p127, %p128
    %p130 = scmp.ne.s32.totalorder %s116, %s117
    %p131 = scmp.eq.s32.totalorder %s19, 7
    %p132 = por %p130, %p131
    %p134 = scmp.ne.s32.totalorder %s117, %s133
    %p135 = scmp.eq.s32.totalorder %s19, 0
    %p136 = por %p134, %p135
    %s137 = ssub.s32 %s22, %s38
    %p138 = scmp.eq.s32.totalorder %s137, 0
    %s140 = sadd.s32 %s139, 1
    %s141 = scalar_select %p138, %s139, %s140
    %p144 = pneg %p138
    %p145 = scmp.eq.s32.totalorder %s13, 7
    %p146 = por %p144, %p145
    %p147 = scmp.ne.s32.totalorder %s139, %s142
    %p148 = scmp.eq.s32.totalorder %s13, 0
    %p149 = por %p147, %p148
    %p150 = scmp.ne.s32.totalorder %s139, %s142
    %p151 = scmp.eq.s32.totalorder %s18, 7
    %p152 = por %p150, %p151
    %p153 = scmp.ne.s32.totalorder %s142, %s143
    %p154 = scmp.eq.s32.totalorder %s18, 0
    %p155 = por %p153, %p154
    %p156 = scmp.ne.s32.totalorder %s142, %s143
    %p157 = scmp.eq.s32.totalorder %s19, 7
    %p158 = por %p156, %p157
    %p160 = scmp.ne.s32.totalorder %s143, %s159
    %p161 = scmp.eq.s32.totalorder %s19, 0
    %p162 = por %p160, %p161
    %s163 = ssub.s32 %s22, %s38
    %p164 = scmp.eq.s32.totalorder %s163, 0
    %s166 = sadd.s32 %s165, 1
    %s167 = scalar_select %p164, %s165, %s166
    %p170 = pneg %p164
    %p171 = scmp.eq.s32.totalorder %s13, 7
    %p172 = por %p170, %p171
    %p173 = scmp.ne.s32.totalorder %s165, %s168
    %p174 = scmp.eq.s32.totalorder %s13, 0
    %p175 = por %p173, %p174
    %p176 = scmp.ne.s32.totalorder %s165, %s168
    %p177 = scmp.eq.s32.totalorder %s18, 7
    %p178 = por %p176, %p177
    %p179 = scmp.ne.s32.totalorder %s168, %s169
    %p180 = scmp.eq.s32.totalorder %s18, 0
    %p181 = por %p179, %p180
    %p182 = scmp.ne.s32.totalorder %s168, %s169
    %p183 = scmp.eq.s32.totalorder %s19, 7
    %p184 = por %p182, %p183
    %p186 = scmp.ne.s32.totalorder %s169, %s185
    %p187 = scmp.eq.s32.totalorder %s19, 0
    %p188 = por %p186, %p187
    %s189 = ssub.s32 %s23, %s34
    %p190 = scmp.eq.s32.totalorder %s189, 0
    %s192 = sadd.s32 %s191, 1
    %s193 = scalar_select %p190, %s191, %s192
    %p196 = pneg %p190
    %p197 = scmp.eq.s32.totalorder %s13, 7
    %p198 = por %p196, %p197
    %p199 = scmp.ne.s32.totalorder %s191, %s194
    %p200 = scmp.eq.s32.totalorder %s13, 0
    %p201 = por %p199, %p200
    %p202 = scmp.ne.s32.totalorder %s191, %s194
    %p203 = scmp.eq.s32.totalorder %s18, 7
    %p204 = por %p202, %p203
    %p205 = scmp.ne.s32.totalorder %s194, %s195
    %p206 = scmp.eq.s32.totalorder %s18, 0
    %p207 = por %p205, %p206
    %p208 = scmp.ne.s32.totalorder %s194, %s195
    %p209 = scmp.eq.s32.totalorder %s19, 7
    %p210 = por %p208, %p209
    %p212 = scmp.ne.s32.totalorder %s195, %s211
    %p213 = scmp.eq.s32.totalorder %s19, 0
    %p214 = por %p212, %p213
    %s215 = ssub.s32 %s23, %s34
    %p216 = scmp.eq.s32.totalorder %s215, 0
    %s218 = sadd.s32 %s217, 1
    %s219 = scalar_select %p216, %s217, %s218
    %p222 = pneg %p216
    %p223 = scmp.eq.s32.totalorder %s13, 7
    %p224 = por %p222, %p223
    %p225 = scmp.ne.s32.totalorder %s217, %s220
    %p226 = scmp.eq.s32.totalorder %s13, 0
    %p227 = por %p225, %p226
    %p228 = scmp.ne.s32.totalorder %s217, %s220
    %p229 = scmp.eq.s32.totalorder %s18, 7
    %p230 = por %p228, %p229
    %p231 = scmp.ne.s32.totalorder %s220, %s221
    %p232 = scmp.eq.s32.totalorder %s18, 0
    %p233 = por %p231, %p232
    %p234 = scmp.ne.s32.totalorder %s220, %s221
    %p235 = scmp.eq.s32.totalorder %s19, 7
    %p236 = por %p234, %p235
    %p238 = scmp.ne.s32.totalorder %s221, %s237
    %p239 = scmp.eq.s32.totalorder %s19, 0
    %p240 = por %p238, %p239
    %s241 = ssub.s32 %s21, %s42
    %s242 = ssub.s32 %s20, %s46
    %s243 = sor.u32 %s241, %s242
    %s244 = ssub.s32 %s22, %s38
    %s245 = sor.u32 %s243, %s244
    %p246 = scmp.eq.s32.totalorder %s245, 0
    %s248 = sadd.s32 %s247, 1
    %s249 = scalar_select %p246, %s247, %s248
    %p252 = pneg %p246
    %p253 = scmp.eq.s32.totalorder %s13, 7
    %p254 = por %p252, %p253
    %p255 = scmp.ne.s32.totalorder %s247, %s250
    %p256 = scmp.eq.s32.totalorder %s13, 0
    %p257 = por %p255, %p256
    %p258 = scmp.ne.s32.totalorder %s247, %s250
    %p259 = scmp.eq.s32.totalorder %s18, 7
    %p260 = por %p258, %p259
    %p261 = scmp.ne.s32.totalorder %s250, %s251
    %p262 = scmp.eq.s32.totalorder %s18, 0
    %p263 = por %p261, %p262
    %p264 = scmp.ne.s32.totalorder %s250, %s251
    %p265 = scmp.eq.s32.totalorder %s19, 7
    %p266 = por %p264, %p265
    %p268 = scmp.ne.s32.totalorder %s251, %s267
    %p269 = scmp.eq.s32.totalorder %s19, 0
    %p270 = por %p268, %p269
    %p271 = scmp.le.s32.totalorder 1, %s13
    %p272 = scmp.lt.s32.totalorder %s13, 9
    %p273 = pnand %p271, %p272
    %p274 = pneg %p273
    // Predicated region
    $region9: #{decoder_block.5} parent=5 // pred_check
      _
    $region10: #{decoder_block.5} parent=5 // pred_check_branch
      %276 = sbr.rel (%p273) target = $region12
    $region11: #{decoder_block.5} parent=5 // pred_region
      %s277 = ssub.s32 %s13, 1
      // Predicated region
      $region13: #{decoder_block.5} parent=11 // pred_check
        %p278 = pneg %p155
      $region14: #{decoder_block.5} parent=11 // pred_check_branch
        %280 = sbr.rel (%p278) target = $region16
      $region15: #{decoder_block.5} parent=11 // pred_region
        %p281 = scmp.lt.s32.totalorder %s26, 0
        %s282 = scalar_select %p281, %s26, 0
        %s283 = smul.addr %s282, 8
        %s284 = scalar_lea.vmem %s3, %s283
      $region16: #{decoder_block.5} parent=11 // pred_fallthru
        _
      // Predicated region
      $region17: #{decoder_block.5} parent=11 // pred_check
        %p285 = pneg %p181
      $region18: #{decoder_block.5} parent=11 // pred_check_branch
        %287 = sbr.rel (%p285) target = $region20
      $region19: #{decoder_block.5} parent=11 // pred_region
        %p288 = scmp.lt.s32.totalorder %s26, 0
        %s289 = scalar_select %p288, %s26, 0
        %s290 = smul.addr %s289, 8
        %s291 = scalar_lea.vmem %s4, %s290
      $region20: #{decoder_block.5} parent=11 // pred_fallthru
        _
      // Predicated region
      $region21: #{decoder_block.5} parent=11 // pred_check
        %p292 = pneg %p207
      $region22: #{decoder_block.5} parent=11 // pred_check_branch
        %294 = sbr.rel (%p292) target = $region24
      $region23: #{decoder_block.5} parent=11 // pred_region
        %p295 = scmp.lt.s32.totalorder %s27, 0
        %s296 = scalar_select %p295, %s27, 0
        %s297 = smul.addr %s296, 8
        %s298 = scalar_lea.vmem %s5, %s297
      $region24: #{decoder_block.5} parent=11 // pred_fallthru
        _
      // Predicated region
      $region25: #{decoder_block.5} parent=11 // pred_check
        %p299 = pneg %p233
      $region26: #{decoder_block.5} parent=11 // pred_check_branch
        %301 = sbr.rel (%p299) target = $region28
      $region27: #{decoder_block.5} parent=11 // pred_region
        %p302 = scmp.lt.s32.totalorder %s27, 0
        %s303 = scalar_select %p302, %s27, 0
        %s304 = smul.addr %s303, 8
        %s305 = scalar_lea.vmem %s6, %s304
      $region28: #{decoder_block.5} parent=11 // pred_fallthru
        _
    $region12: #{decoder_block.5} parent=5 // pred_fallthru
      _
    %p306 = scmp.lt.s32.totalorder %s13, 8
    // Predicated region
    $region29: #{decoder_block.5} parent=5 // pred_check
      %p307 = pneg %p306
    $region30: #{decoder_block.5} parent=5 // pred_check_branch
      %309 = sbr.rel (%p307) target = $region32
    $region31: #{decoder_block.5} parent=5 // pred_region
      // Predicated region
      $region33: #{decoder_block.5} parent=31 // pred_check
        %p310 = pneg %p63
      $region34: #{decoder_block.5} parent=31 // pred_check_branch
        %312 = sbr.rel (%p310) target = $region36
      $region35: #{decoder_block.5} parent=31 // pred_region
        %p313 = scmp.lt.s32.totalorder %s21, 3
        %s314 = scalar_select %p313, %s21, 3
        %p315 = scmp.lt.s32.totalorder %s20, 1
        %s316 = scalar_select %p315, %s20, 1
        %p317 = scmp.lt.s32.totalorder %s22, 0
        %s318 = scalar_select %p317, %s22, 0
        %s319 = sadd.s32 %s318, %s316
        %s320 = smul.addr %s314, 2
        %s321 = sadd.s32 %s319, %s320
        %s322 = smul.addr %s321, 4
        %s323 = scalar_lea.vmem %s0, %s322
      $region36: #{decoder_block.5} parent=31 // pred_fallthru
        _
      // Predicated region
      $region37: #{decoder_block.5} parent=31 // pred_check
        %p324 = pneg %p93
      $region38: #{decoder_block.5} parent=31 // pred_check_branch
        %326 = sbr.rel (%p324) target = $region40
      $region39: #{decoder_block.5} parent=31 // pred_region
        %p327 = scmp.lt.s32.totalorder %s21, 3
        %s328 = scalar_select %p327, %s21, 3
        %p329 = scmp.lt.s32.totalorder %s20, 1
        %s330 = scalar_select %p329, %s20, 1
        %p331 = scmp.lt.s32.totalorder %s23, 0
        %s332 = scalar_select %p331, %s23, 0
        %s333 = sadd.s32 %s332, %s330
        %s334 = smul.addr %s328, 2
        %s335 = sadd.s32 %s333, %s334
        %s336 = sadd.s32 %s335, 8
        %s337 = smul.addr %s336, 4
        %s338 = scalar_lea.vmem %s1, %s337
      $region40: #{decoder_block.5} parent=31 // pred_fallthru
        _
      // Predicated region
      $region41: #{decoder_block.5} parent=31 // pred_check
        %p339 = pneg %p123
      $region42: #{decoder_block.5} parent=31 // pred_check_branch
        %341 = sbr.rel (%p339) target = $region44
      $region43: #{decoder_block.5} parent=31 // pred_region
        %p342 = scmp.lt.s32.totalorder %s21, 3
        %s343 = scalar_select %p342, %s21, 3
        %p344 = scmp.lt.s32.totalorder %s20, 1
        %s345 = scalar_select %p344, %s20, 1
        %p346 = scmp.lt.s32.totalorder %s23, 0
        %s347 = scalar_select %p346, %s23, 0
        %s348 = sadd.s32 %s347, %s345
        %s349 = smul.addr %s343, 2
        %s350 = sadd.s32 %s348, %s349
        %s351 = sadd.s32 %s350, 16
        %s352 = smul.addr %s351, 4
        %s353 = scalar_lea.vmem %s2, %s352
      $region44: #{decoder_block.5} parent=31 // pred_fallthru
        _
    $region32: #{decoder_block.5} parent=5 // pred_fallthru
      _
    %p354 = scmp.le.s32.totalorder 1, %s13
    %p355 = scmp.lt.s32.totalorder %s13, 9
    %p356 = pnand %p354, %p355
    %p357 = pneg %p356
    // Predicated region
    $region45: #{decoder_block.5} parent=5 // pred_check
      _
    $region46: #{decoder_block.5} parent=5 // pred_check_branch
      %359 = sbr.rel (%p356) target = $region48
    $region47: #{decoder_block.5} parent=5 // pred_region
      %s360 = ssub.s32 %s13, 1
      %p361 = scmp.lt.s32.totalorder %s25, 3
      %s362 = scalar_select %p361, %s25, 3
      %p363 = scmp.lt.s32.totalorder %s24, 1
      %s364 = scalar_select %p363, %s24, 1
      %p365 = scmp.lt.s32.totalorder %s26, 0
      %s366 = scalar_select %p365, %s26, 0
      %s367 = sadd.s32 %s366, %s364
      %s368 = smul.addr %s362, 2
      %s369 = sadd.s32 %s367, %s368
      %s370 = smul.addr %s369, 4
      %s371 = scalar_lea.vmem %s0, %s370
      %p372 = pneg %p69
      %p373 = pneg %p66
      %p374 = scmp.lt.s32.totalorder %s25, 3
      %s375 = scalar_select %p374, %s25, 3
      %p376 = scmp.lt.s32.totalorder %s24, 1
      %s377 = scalar_select %p376, %s24, 1
      %p378 = scmp.lt.s32.totalorder %s27, 0
      %s379 = scalar_select %p378, %s27, 0
      %s380 = sadd.s32 %s379, %s377
      %s381 = smul.addr %s375, 2
      %s382 = sadd.s32 %s380, %s381
      %s383 = sadd.s32 %s382, 8
      %s384 = smul.addr %s383, 4
      %s385 = scalar_lea.vmem %s1, %s384
      %p386 = pneg %p99
      %p387 = pneg %p96
      %p388 = scmp.lt.s32.totalorder %s25, 3
      %s389 = scalar_select %p388, %s25, 3
      %p390 = scmp.lt.s32.totalorder %s24, 1
      %s391 = scalar_select %p390, %s24, 1
      %p392 = scmp.lt.s32.totalorder %s27, 0
      %s393 = scalar_select %p392, %s27, 0
      %s394 = sadd.s32 %s393, %s391
      %s395 = smul.addr %s389, 2
      %s396 = sadd.s32 %s394, %s395
      %s397 = sadd.s32 %s396, 16
      %s398 = smul.addr %s397, 4
      %s399 = scalar_lea.vmem %s2, %s398
      %p400 = pneg %p129
      %p401 = pneg %p126
      %p402 = scmp.lt.s32.totalorder %s26, 0
      %s403 = scalar_select %p402, %s26, 0
      %s404 = smul.addr %s403, 8
      %s405 = scalar_lea.vmem %s3, %s404
      %p406 = pneg %p155
      %p407 = pneg %p152
      %p408 = scmp.lt.s32.totalorder %s26, 0
      %s409 = scalar_select %p408, %s26, 0
      %s410 = smul.addr %s409, 8
      %s411 = scalar_lea.vmem %s4, %s410
      %p412 = pneg %p181
      %p413 = pneg %p178
      %p414 = scmp.lt.s32.totalorder %s27, 0
      %s415 = scalar_select %p414, %s27, 0
      %s416 = smul.addr %s415, 8
      %s417 = scalar_lea.vmem %s5, %s416
      %p418 = pneg %p207
      %p419 = pneg %p204
      %p420 = scmp.lt.s32.totalorder %s27, 0
      %s421 = scalar_select %p420, %s27, 0
      %s422 = smul.addr %s421, 8
      %s423 = scalar_lea.vmem %s6, %s422
      %p424 = pneg %p233
      %p425 = pneg %p230
      %p426 = pneg %p263
      %p427 = pneg %p260
      %p428 = scmp.lt.s32.totalorder %s25, 3
      %s429 = scalar_select %p428, %s25, 3
      %p430 = scmp.lt.s32.totalorder %s24, 1
      %s431 = scalar_select %p430, %s24, 1
      %p432 = scmp.lt.s32.totalorder %s26, 0
      %s433 = scalar_select %p432, %s26, 0
      %s434 = sadd.s32 %s433, %s431
      %s435 = smul.addr %s429, 2
      %s436 = sadd.s32 %s434, %s435
      %s437 = smul.addr %s436, 4
      %s438 = scalar_lea.vmem %s7, %s437
      %p439 = scmp.lt.s32.totalorder %s25, 3
      %s440 = scalar_select %p439, %s25, 3
      %p441 = scmp.lt.s32.totalorder %s24, 1
      %s442 = scalar_select %p441, %s24, 1
      %p443 = scmp.lt.s32.totalorder %s26, 0
      %s444 = scalar_select %p443, %s26, 0
      %s445 = sadd.s32 %s444, %s442
      %s446 = smul.addr %s440, 2
      %s447 = sadd.s32 %s445, %s446
      %s448 = smul.addr %s447, 4
      %s449 = scalar_lea.vmem %s0, %s448
      %p450 = scmp.lt.s32.totalorder %s25, 3
      %s451 = scalar_select %p450, %s25, 3
      %p452 = scmp.lt.s32.totalorder %s24, 1
      %s453 = scalar_select %p452, %s24, 1
      %p454 = scmp.lt.s32.totalorder %s27, 0
      %s455 = scalar_select %p454, %s27, 0
      %s456 = sadd.s32 %s455, %s453
      %s457 = smul.addr %s451, 2
      %s458 = sadd.s32 %s456, %s457
      %s459 = sadd.s32 %s458, 8
      %s460 = smul.addr %s459, 4
      %s461 = scalar_lea.vmem %s1, %s460
      %p462 = scmp.lt.s32.totalorder %s25, 3
      %s463 = scalar_select %p462, %s25, 3
      %p464 = scmp.lt.s32.totalorder %s24, 1
      %s465 = scalar_select %p464, %s24, 1
      %p466 = scmp.lt.s32.totalorder %s27, 0
      %s467 = scalar_select %p466, %s27, 0
      %s468 = sadd.s32 %s467, %s465
      %s469 = smul.addr %s463, 2
      %s470 = sadd.s32 %s468, %s469
      %s471 = sadd.s32 %s470, 16
      %s472 = smul.addr %s471, 4
      %s473 = scalar_lea.vmem %s2, %s472
      %p474 = scmp.lt.s32.totalorder %s26, 0
      %s475 = scalar_select %p474, %s26, 0
      %s476 = smul.addr %s475, 8
      %s477 = scalar_lea.vmem %s3, %s476
      %p478 = scmp.lt.s32.totalorder %s26, 0
      %s479 = scalar_select %p478, %s26, 0
      %s480 = smul.addr %s479, 8
      %s481 = scalar_lea.vmem %s4, %s480
      %p482 = scmp.lt.s32.totalorder %s27, 0
      %s483 = scalar_select %p482, %s27, 0
      %s484 = smul.addr %s483, 8
      %s485 = scalar_lea.vmem %s5, %s484
      %p486 = scmp.lt.s32.totalorder %s27, 0
      %s487 = scalar_select %p486, %s27, 0
      %s488 = smul.addr %s487, 8
      %s489 = scalar_lea.vmem %s6, %s488
      %p490 = scmp.lt.s32.totalorder %s25, 3
      %s491 = scalar_select %p490, %s25, 3
      %p492 = scmp.lt.s32.totalorder %s24, 1
      %s493 = scalar_select %p492, %s24, 1
      %p494 = scmp.lt.s32.totalorder %s26, 0
      %s495 = scalar_select %p494, %s26, 0
      %s496 = sadd.s32 %s495, %s493
      %s497 = smul.addr %s491, 2
      %s498 = sadd.s32 %s496, %s497
      %s499 = smul.addr %s498, 4
      %s500 = scalar_lea.vmem %s7, %s499
      %p502 = scmp.eq.s32.totalorder %s27, 0
      // Predicated region
      $region49: #{decoder_block.5} parent=47 // pred_check
        %p503 = pneg %p502
      $region50: #{decoder_block.5} parent=47 // pred_check_branch
        %505 = sbr.rel (%p503) target = $region52
      $region51: #{decoder_block.5} parent=47 // pred_region
        %vm506 = vcmask 7168
        %507 = vst.msk [vmem:[#allocation2] sm:$0xff] %vm506, -inf
        %508 = vst.msk [vmem:[#allocation3] sm:$0xff] %vm506, 0.0
        %vm509 = vcmask 64512
        %510 = vst.msk [vmem:[#allocation4] sm:$0xff] %vm509, 0.0
      $region52: #{decoder_block.5} parent=47 // pred_fallthru
        _
      %p511 = scmp.eq.s32.totalorder %s27, %s26
      // Predicated region
      $region53: #{decoder_block.5} parent=47 // pred_check
        %p512 = pneg %p511
      $region54: #{decoder_block.5} parent=47 // pred_check_branch
        %514 = sbr.rel (%p512) target = $region56
      $region55: #{decoder_block.5} parent=47 // pred_region
        %v515 = vld [vmem:[%s449] sm:$0xf]
        %v516 = vld [vmem:[%s477] sm:$0xff]
        %v517 = vld [vmem:[%s481] sm:$0xff]
        %v519 = vunpack.c.l.b16 %v515
        %v520 = vpack.c.b16 %v519, %v519
        %521 = vrot.lane.b32.xlu0 %v520, 124
        %v522 = vpop.permute.xlu0 %521
        %523 = vrot.lane.b32.xlu0 %v520, 4
        %v524 = vpop.permute.xlu0 %523
        %vm525 = vcmask 31744
        %v528 = vsel %vm525, %v522, %v524
        %v530 = vunpack.c.l.bf16 %v515
        %v531 = vmul.f32 %v530, %v516
        %v532 = vunpack.c.l.bf16 %v528
        %v533 = vmul.f32 %v532, %v517
        %v534 = vadd.f32 %v531, %v533
        %v535 = vmul.f32 %v534, 0.35355338
        %v536 = vld [vmem:[%s461] sm:$0xf]
        %v537 = vld [vmem:[%s485] sm:$0xff]
        %v538 = vld [vmem:[%s489] sm:$0xff]
        %v540 = vunpack.c.l.b16 %v536
        %v541 = vpack.c.b16 %v540, %v540
        %542 = vrot.lane.b32.xlu0 %v541, 124
        %v543 = vpop.permute.xlu0 %542
        %544 = vrot.lane.b32.xlu0 %v541, 4
        %v545 = vpop.permute.xlu0 %544
        %v548 = vsel %vm525, %v543, %v545
        %v550 = vunpack.c.l.bf16 %v536
        %v551 = vmul.f32 %v550, %v537
        %v552 = vunpack.c.l.bf16 %v548
        %v553 = vmul.f32 %v552, %v538
        %v554 = vadd.f32 %v551, %v553
        %v555 = vld [vmem:[%s473] sm:$0xf]
        %v556 = vpack.c.bf16 %v535, %v535
        %v557 = vpack.c.bf16 %v554, %v554
        %vm558 = vcmask 64512
        %v560 = vsel %vm558, %v556, 0
        %v563 = vsel %vm558, %v557, 0
        %565 = vmatprep.subr.bf16.mxu0 0
        %566 = vmatpush1.bf16.xpose.msra.mxu0 0
        %567 = vmatprep.subr.bf16.mxu0 0
        %568 = vmatpush1.bf16.xpose.msra.mxu0 0
        %569 = vmatprep.subr.bf16.mxu0 0
        %570 = vmatpush1.bf16.xpose.msra.mxu0 0
        %571 = vmatprep.subr.bf16.mxu0 0
        %572 = vmatpush1.bf16.xpose.msra.mxu0 0
        %573 = vmatprep.subr.bf16.mxu0 0
        %574 = vmatpush1.bf16.xpose.msra.mxu0 0
        %575 = vmatprep.subr.bf16.mxu0 0
        %576 = vmatpush1.bf16.xpose.msra.mxu0 0
        %577 = vmatprep.subr.bf16.mxu0 0
        %578 = vmatpush1.bf16.xpose.msra.mxu0 0
        %579 = vmatprep.subr.bf16.mxu0 0
        %580 = vmatpush1.bf16.xpose.msra.mxu0 %v563
        %581 = vmatprep.subr.bf16.mxu0 0
        %582 = vmatpush2.bf16.xpose.msra.mxu0 0
        %583 = vmatprep.subr.bf16.mxu0 0
        %584 = vmatpush2.bf16.xpose.msra.mxu0 0
        %585 = vmatprep.subr.bf16.mxu0 0
        %586 = vmatpush2.bf16.xpose.msra.mxu0 0
        %587 = vmatprep.subr.bf16.mxu0 0
        %588 = vmatpush2.bf16.xpose.msra.mxu0 0
        %589 = vmatprep.subr.bf16.mxu0 0
        %590 = vmatpush2.bf16.xpose.msra.mxu0 0
        %591 = vmatprep.subr.bf16.mxu0 0
        %592 = vmatpush2.bf16.xpose.msra.mxu0 0
        %593 = vmatprep.subr.bf16.mxu0 0
        %594 = vmatpush2.bf16.xpose.msra.mxu0 0
        %595 = vmatprep.subr.bf16.mxu0 0
        %596 = vmatpush2.bf16.xpose.msra.mxu0 0
        %597 = vmatprep.mubr.bf16.mxu0 0
        %598 = vmatmul.mubr.bf16.gmra.mxu0 %v560
        %v599 = vpop.f32.mrf.mxu0
        %v600 = vadd.f32 0.0, %v599
        %v601 = vpop.f32.mrf.mxu0
        %v602 = vpop.f32.mrf.mxu0
        %v603 = vpop.f32.mrf.mxu0
        %604 = vdwg.mxu0
        %s605 = smul.u32 %s26, 8
        %v606 = vlaneseq
        %v607 = vshrl.u32 %v606, 7
        %v608 = vstv %s605
        %v609 = vadd.s32 %v608, %v607
        %s610 = smul.u32 %s27, 8
        %v611 = vlaneseq
        %v612 = vand.u32 %v611, 127
        %v613 = vstv %s610
        %v614 = vadd.s32 %v613, %v612
        %vm615 = vcmp.le.s32.totalorder %v614, %v609
        %v616 = vsel %vm615, %v600, -1e+09
        %v617 = vld [vmem:[#allocation2] sm:$0xff]
        %v618 = vsel %vm558, %v616, -inf
        %619 = vmax.xlane.f32.xlu0 %v618
        %v620 = vpop.xlane.xlu0 %619
        %v621 = vmax.f32 %v617, %v620
        %v622 = vsub.f32 %v617, %v621
        %v623 = vmul.f32 %v622, 1.442695
        %v624 = vpow.pop %v623
        %626 = vset.pattern.permute.xlu0 0
        %627 = vperm.xlu0 %626, %v621
        %v628 = vpop.permute.xlu0 %627
        %v630 = vsub.f32 %v616, %v628
        %v631 = vmul.f32 %v630, 1.442695
        %v632 = vpow.pop %v631
        %v633 = vld [vmem:[#allocation3] sm:$0xff]
        %v634 = vmul.f32 %v624, %v633
        %v635 = vsel %vm558, %v632, 0.0
        %636 = vadd.xlane.f32.xlu0 %v635
        %v637 = vpop.xlane.xlu0 %636
        %v638 = vadd.f32 %v634, %v637
        %vm639 = vcmask 7168
        %640 = vst.msk [vmem:[#allocation3] sm:$0xff] %vm639, %v638
        %v641 = vld [vmem:[#allocation4] sm:$0xff]
        %643 = vset.pattern.permute.xlu0 0
        %644 = vperm.xlu0 %643, %v624
        %v645 = vpop.permute.xlu0 %644
        %v647 = vmul.f32 %v645, %v641
        %v648 = vpack.c.bf16 %v632, %v632
        %v650 = vsel %vm558, %v648, 0
        %vm652 = vcmask 1043456
        %v654 = vsel %vm652, %v555, 0
        %656 = vmatprep.subr.bf16.mxu0 0
        %657 = vmatpush1.bf16.msra.mxu0 0
        %658 = vmatprep.subr.bf16.mxu0 0
        %659 = vmatpush1.bf16.msra.mxu0 0
        %660 = vmatprep.subr.bf16.mxu0 0
        %661 = vmatpush1.bf16.msra.mxu0 0
        %662 = vmatprep.subr.bf16.mxu0 0
        %663 = vmatpush1.bf16.msra.mxu0 0
        %664 = vmatprep.subr.bf16.mxu0 0
        %665 = vmatpush1.bf16.msra.mxu0 0
        %666 = vmatprep.subr.bf16.mxu0 0
        %667 = vmatpush1.bf16.msra.mxu0 0
        %668 = vmatprep.subr.bf16.mxu0 0
        %669 = vmatpush1.bf16.msra.mxu0 0
        %670 = vmatprep.subr.bf16.mxu0 0
        %671 = vmatpush1.bf16.msra.mxu0 %v654
        %672 = vmatprep.subr.bf16.mxu0 0
        %673 = vmatpush2.bf16.msra.mxu0 0
        %674 = vmatprep.subr.bf16.mxu0 0
        %675 = vmatpush2.bf16.msra.mxu0 0
        %676 = vmatprep.subr.bf16.mxu0 0
        %677 = vmatpush2.bf16.msra.mxu0 0
        %678 = vmatprep.subr.bf16.mxu0 0
        %679 = vmatpush2.bf16.msra.mxu0 0
        %680 = vmatprep.subr.bf16.mxu0 0
        %681 = vmatpush2.bf16.msra.mxu0 0
        %682 = vmatprep.subr.bf16.mxu0 0
        %683 = vmatpush2.bf16.msra.mxu0 0
        %684 = vmatprep.subr.bf16.mxu0 0
        %685 = vmatpush2.bf16.msra.mxu0 0
        %686 = vmatprep.subr.bf16.mxu0 0
        %687 = vmatpush2.bf16.msra.mxu0 0
        %688 = vmatprep.mubr.bf16.mxu0 0
        %689 = vmatmul.mubr.bf16.gmra.mxu0 %v650
        %v690 = vpop.f32.mrf.mxu0
        %v691 = vadd.f32 0.0, %v690
        %v692 = vpop.f32.mrf.mxu0
        %v693 = vpop.f32.mrf.mxu0
        %v694 = vpop.f32.mrf.mxu0
        %695 = vdwg.mxu0
        %v696 = vadd.f32 %v647, %v691
        %697 = vst.msk [vmem:[#allocation4] sm:$0xff] %vm558, %v696
        %698 = vst.msk [vmem:[#allocation2] sm:$0xff] %vm639, %v621
      $region56: #{decoder_block.5} parent=47 // pred_fallthru
        _
      %p699 = scmp.lt.s32.totalorder %s27, %s26
      // Predicated region
      $region57: #{decoder_block.5} parent=47 // pred_check
        %p700 = pneg %p699
      $region58: #{decoder_block.5} parent=47 // pred_check_branch
        %702 = sbr.rel (%p700) target = $region60
      $region59: #{decoder_block.5} parent=47 // pred_region
        %v703 = vld [vmem:[%s449] sm:$0xf]
        %v704 = vld [vmem:[%s477] sm:$0xff]
        %v705 = vld [vmem:[%s481] sm:$0xff]
        %v707 = vunpack.c.l.b16 %v703
        %v708 = vpack.c.b16 %v707, %v707
        %709 = vrot.lane.b32.xlu0 %v708, 124
        %v710 = vpop.permute.xlu0 %709
        %711 = vrot.lane.b32.xlu0 %v708, 4
        %v712 = vpop.permute.xlu0 %711
        %vm713 = vcmask 31744
        %v716 = vsel %vm713, %v710, %v712
        %v718 = vunpack.c.l.bf16 %v703
        %v719 = vmul.f32 %v718, %v704
        %v720 = vunpack.c.l.bf16 %v716
        %v721 = vmul.f32 %v720, %v705
        %v722 = vadd.f32 %v719, %v721
        %v723 = vmul.f32 %v722, 0.35355338
        %v724 = vld [vmem:[%s461] sm:$0xf]
        %v725 = vld [vmem:[%s485] sm:$0xff]
        %v726 = vld [vmem:[%s489] sm:$0xff]
        %v728 = vunpack.c.l.b16 %v724
        %v729 = vpack.c.b16 %v728, %v728
        %730 = vrot.lane.b32.xlu0 %v729, 124
        %v731 = vpop.permute.xlu0 %730
        %732 = vrot.lane.b32.xlu0 %v729, 4
        %v733 = vpop.permute.xlu0 %732
        %v736 = vsel %vm713, %v731, %v733
        %v738 = vunpack.c.l.bf16 %v724
        %v739 = vmul.f32 %v738, %v725
        %v740 = vunpack.c.l.bf16 %v736
        %v741 = vmul.f32 %v740, %v726
        %v742 = vadd.f32 %v739, %v741
        %v743 = vld [vmem:[%s473] sm:$0xf]
        %v744 = vpack.c.bf16 %v723, %v723
        %v745 = vpack.c.bf16 %v742, %v742
        %vm746 = vcmask 64512
        %v748 = vsel %vm746, %v744, 0
        %v751 = vsel %vm746, %v745, 0
        %753 = vmatprep.subr.bf16.mxu0 0
        %754 = vmatpush1.bf16.xpose.msra.mxu0 0
        %755 = vmatprep.subr.bf16.mxu0 0
        %756 = vmatpush1.bf16.xpose.msra.mxu0 0
        %757 = vmatprep.subr.bf16.mxu0 0
        %758 = vmatpush1.bf16.xpose.msra.mxu0 0
        %759 = vmatprep.subr.bf16.mxu0 0
        %760 = vmatpush1.bf16.xpose.msra.mxu0 0
        %761 = vmatprep.subr.bf16.mxu0 0
        %762 = vmatpush1.bf16.xpose.msra.mxu0 0
        %763 = vmatprep.subr.bf16.mxu0 0
        %764 = vmatpush1.bf16.xpose.msra.mxu0 0
        %765 = vmatprep.subr.bf16.mxu0 0
        %766 = vmatpush1.bf16.xpose.msra.mxu0 0
        %767 = vmatprep.subr.bf16.mxu0 0
        %768 = vmatpush1.bf16.xpose.msra.mxu0 %v751
        %769 = vmatprep.subr.bf16.mxu0 0
        %770 = vmatpush2.bf16.xpose.msra.mxu0 0
        %771 = vmatprep.subr.bf16.mxu0 0
        %772 = vmatpush2.bf16.xpose.msra.mxu0 0
        %773 = vmatprep.subr.bf16.mxu0 0
        %774 = vmatpush2.bf16.xpose.msra.mxu0 0
        %775 = vmatprep.subr.bf16.mxu0 0
        %776 = vmatpush2.bf16.xpose.msra.mxu0 0
        %777 = vmatprep.subr.bf16.mxu0 0
        %778 = vmatpush2.bf16.xpose.msra.mxu0 0
        %779 = vmatprep.subr.bf16.mxu0 0
        %780 = vmatpush2.bf16.xpose.msra.mxu0 0
        %781 = vmatprep.subr.bf16.mxu0 0
        %782 = vmatpush2.bf16.xpose.msra.mxu0 0
        %783 = vmatprep.subr.bf16.mxu0 0
        %784 = vmatpush2.bf16.xpose.msra.mxu0 0
        %785 = vmatprep.mubr.bf16.mxu0 0
        %786 = vmatmul.mubr.bf16.gmra.mxu0 %v748
        %v787 = vpop.f32.mrf.mxu0
        %v788 = vadd.f32 0.0, %v787
        %v789 = vpop.f32.mrf.mxu0
        %v790 = vpop.f32.mrf.mxu0
        %v791 = vpop.f32.mrf.mxu0
        %792 = vdwg.mxu0
        %v793 = vld [vmem:[#allocation2] sm:$0xff]
        %v794 = vsel %vm746, %v788, -inf
        %795 = vmax.xlane.f32.xlu0 %v794
        %v796 = vpop.xlane.xlu0 %795
        %v797 = vmax.f32 %v793, %v796
        %v798 = vsub.f32 %v793, %v797
        %v799 = vmul.f32 %v798, 1.442695
        %v800 = vpow.pop %v799
        %802 = vset.pattern.permute.xlu0 0
        %803 = vperm.xlu0 %802, %v797
        %v804 = vpop.permute.xlu0 %803
        %v806 = vsub.f32 %v788, %v804
        %v807 = vmul.f32 %v806, 1.442695
        %v808 = vpow.pop %v807
        %v809 = vld [vmem:[#allocation3] sm:$0xff]
        %v810 = vmul.f32 %v800, %v809
        %v811 = vsel %vm746, %v808, 0.0
        %812 = vadd.xlane.f32.xlu0 %v811
        %v813 = vpop.xlane.xlu0 %812
        %v814 = vadd.f32 %v810, %v813
        %vm815 = vcmask 7168
        %816 = vst.msk [vmem:[#allocation3] sm:$0xff] %vm815, %v814
        %v817 = vld [vmem:[#allocation4] sm:$0xff]
        %819 = vset.pattern.permute.xlu0 0
        %820 = vperm.xlu0 %819, %v800
        %v821 = vpop.permute.xlu0 %820
        %v823 = vmul.f32 %v821, %v817
        %v824 = vpack.c.bf16 %v808, %v808
        %v826 = vsel %vm746, %v824, 0
        %vm828 = vcmask 1043456
        %v830 = vsel %vm828, %v743, 0
        %832 = vmatprep.subr.bf16.mxu0 0
        %833 = vmatpush1.bf16.msra.mxu0 0
        %834 = vmatprep.subr.bf16.mxu0 0
        %835 = vmatpush1.bf16.msra.mxu0 0
        %836 = vmatprep.subr.bf16.mxu0 0
        %837 = vmatpush1.bf16.msra.mxu0 0
        %838 = vmatprep.subr.bf16.mxu0 0
        %839 = vmatpush1.bf16.msra.mxu0 0
        %840 = vmatprep.subr.bf16.mxu0 0
        %841 = vmatpush1.bf16.msra.mxu0 0
        %842 = vmatprep.subr.bf16.mxu0 0
        %843 = vmatpush1.bf16.msra.mxu0 0
        %844 = vmatprep.subr.bf16.mxu0 0
        %845 = vmatpush1.bf16.msra.mxu0 0
        %846 = vmatprep.subr.bf16.mxu0 0
        %847 = vmatpush1.bf16.msra.mxu0 %v830
        %848 = vmatprep.subr.bf16.mxu0 0
        %849 = vmatpush2.bf16.msra.mxu0 0
        %850 = vmatprep.subr.bf16.mxu0 0
        %851 = vmatpush2.bf16.msra.mxu0 0
        %852 = vmatprep.subr.bf16.mxu0 0
        %853 = vmatpush2.bf16.msra.mxu0 0
        %854 = vmatprep.subr.bf16.mxu0 0
        %855 = vmatpush2.bf16.msra.mxu0 0
        %856 = vmatprep.subr.bf16.mxu0 0
        %857 = vmatpush2.bf16.msra.mxu0 0
        %858 = vmatprep.subr.bf16.mxu0 0
        %859 = vmatpush2.bf16.msra.mxu0 0
        %860 = vmatprep.subr.bf16.mxu0 0
        %861 = vmatpush2.bf16.msra.mxu0 0
        %862 = vmatprep.subr.bf16.mxu0 0
        %863 = vmatpush2.bf16.msra.mxu0 0
        %864 = vmatprep.mubr.bf16.mxu0 0
        %865 = vmatmul.mubr.bf16.gmra.mxu0 %v826
        %v866 = vpop.f32.mrf.mxu0
        %v867 = vadd.f32 0.0, %v866
        %v868 = vpop.f32.mrf.mxu0
        %v869 = vpop.f32.mrf.mxu0
        %v870 = vpop.f32.mrf.mxu0
        %871 = vdwg.mxu0
        %v872 = vadd.f32 %v823, %v867
        %873 = vst.msk [vmem:[#allocation4] sm:$0xff] %vm746, %v872
        %874 = vst.msk [vmem:[#allocation2] sm:$0xff] %vm815, %v797
      $region60: #{decoder_block.5} parent=47 // pred_fallthru
        _
      // Predicated region
      $region61: #{decoder_block.5} parent=47 // pred_check
        %p875 = pneg %p502
      $region62: #{decoder_block.5} parent=47 // pred_check_branch
        %877 = sbr.rel (%p875) target = $region64
      $region63: #{decoder_block.5} parent=47 // pred_region
        %v878 = vld [vmem:[#allocation3] sm:$0xff]
        %v879 = vrcp.pop %v878
        %v880 = vld [vmem:[#allocation4] sm:$0xff]
        %882 = vset.pattern.permute.xlu0 0
        %883 = vperm.xlu0 %882, %v879
        %v884 = vpop.permute.xlu0 %883
        %v886 = vmul.f32 %v880, %v884
        %v887 = vpack.c.bf16 %v886, %v886
        %vm888 = vcmask 60416
        %889 = vst.msk [vmem:[%s500] sm:$0xf] %vm888, %v887
      $region64: #{decoder_block.5} parent=47 // pred_fallthru
        _
      %p890 = scmp.lt.s32.totalorder %s25, 3
      %s891 = scalar_select %p890, %s25, 3
      %p892 = scmp.lt.s32.totalorder %s24, 1
      %s893 = scalar_select %p892, %s24, 1
      %p894 = scmp.lt.s32.totalorder %s26, 0
      %s895 = scalar_select %p894, %s26, 0
      %s896 = sadd.s32 %s895, %s893
      %s897 = smul.addr %s891, 2
      %s898 = sadd.s32 %s896, %s897
      %s899 = smul.addr %s898, 4
      %s900 = scalar_lea.vmem %s7, %s899
      // Predicated region
      $region65: #{decoder_block.5} parent=47 // pred_check
        %p901 = pneg %p260
      $region66: #{decoder_block.5} parent=47 // pred_check_branch
        %903 = sbr.rel (%p901) target = $region68
      $region67: #{decoder_block.5} parent=47 // pred_region
        _
      $region68: #{decoder_block.5} parent=47 // pred_fallthru
        _
    $region48: #{decoder_block.5} parent=5 // pred_fallthru
      _
    %p904 = scmp.le.s32.totalorder 2, %s13
    // Predicated region
    $region69: #{decoder_block.5} parent=5 // pred_check
      %p905 = pneg %p904
    $region70: #{decoder_block.5} parent=5 // pred_check_branch
      %907 = sbr.rel (%p905) target = $region72
    $region71: #{decoder_block.5} parent=5 // pred_region
      %s908 = ssub.s32 %s13, 2
      // Predicated region
      $region73: #{decoder_block.5} parent=71 // pred_check
        %p909 = pneg %p266
      $region74: #{decoder_block.5} parent=71 // pred_check_branch
        %911 = sbr.rel (%p909) target = $region76
      $region75: #{decoder_block.5} parent=71 // pred_region
        %p912 = scmp.lt.s32.totalorder %s29, 3
        %s913 = scalar_select %p912, %s29, 3
        %p914 = scmp.lt.s32.totalorder %s28, 1
        %s915 = scalar_select %p914, %s28, 1
        %p916 = scmp.lt.s32.totalorder %s30, 0
        %s917 = scalar_select %p916, %s30, 0
        %s918 = sadd.s32 %s917, %s915
        %s919 = smul.addr %s913, 2
        %s920 = sadd.s32 %s918, %s919
        %s921 = smul.addr %s920, 4
        %s922 = scalar_lea.vmem %s7, %s921
      $region76: #{decoder_block.5} parent=71 // pred_fallthru
        _
    $region72: #{decoder_block.5} parent=5 // pred_fallthru
      _
  $region6: #{decoder_block.5} parent=0 // loop_footer
    %s17 = sadd.s32 1, %s13
  $region7: #{decoder_block.5} parent=0 // loop_footer_branch
    %12 = sbr.rel target = $region3
  $region8: #{decoder_block.5} parent=0 // loop_exit
    _

// kernel: decoder_block.7
$region0: #{decoder_block.7}
  #allocation0 [shape = 'u32[]', space=smem, size = 0x4, offset = 0x4, fixed_abs, tag = 'smem constant byte address 0x4 - core index']
  #allocation1 [shape = 'u32[144,128]{1,0:T(1,128)}', space=vmem, size = 0x12000, scoped, tag = 'internal scratch']
  #allocation2 [shape = 'bf16[16,32]{1,0:T(8,128)(2,1)}', space=vmem, size = 0x1000, scoped, tag = 'scratch operand']
  %s0 = inlined_call_operand.vmem [shape: f32[16,32], index: 0, kind: input, shape index: {}]
  %s1 = inlined_call_operand.vmem [shape: f32[1,32], index: 1, kind: input, shape index: {}]
  %s2 = inlined_call_operand.vmem [shape: bf16[32,64], index: 2, kind: input, shape index: {}]
  %s3 = inlined_call_operand.vmem [shape: bf16[32,64], index: 3, kind: input, shape index: {}]
  %s4 = inlined_call_operand.vmem [shape: bf16[64,32], index: 4, kind: input, shape index: {}]
  %s5 = inlined_call_operand.hbm [shape: f32[16,32], index: 5, kind: output, shape index: {}]
  %s6 = sld [smem:[#allocation0]]
  $region34: #{decoder_block.7} parent=0
    _
  %s8 = ssub.s32 1, %s6
  %s9 = scalar_select 0, %s8, %s6
  $region1: #{decoder_block.7} parent=0
    #allocation3 [shape = 'u8[8192]{0}', space=vmem, size = 0x2000, scoped, tag = 'output window, operand 0, single buffered']
    #allocation4 [shape = 's32[1]{0}', space=sflag, size = 0x4, scoped, tag = 'scoped memory for decoder_block.7']
    %10 = vsyncpa [#allocation4], 0
    // Predicated region
    $region2: #{decoder_block.7} parent=1 // pred_check
      _
    $region3: #{decoder_block.7} parent=1 // pred_check_branch
      %12 = sbr.rel (0) target = $region5
    $region4: #{decoder_block.7} parent=1 // pred_region
      _
    $region5: #{decoder_block.7} parent=1 // pred_fallthru
      _
    // Predicated region
    $region6: #{decoder_block.7} parent=1 // pred_check
      _
    $region7: #{decoder_block.7} parent=1 // pred_check_branch
      %14 = sbr.rel (0) target = $region9
    $region8: #{decoder_block.7} parent=1 // pred_region
      _
    $region9: #{decoder_block.7} parent=1 // pred_fallthru
      _
    // Predicated region
    $region10: #{decoder_block.7} parent=1 // pred_check
      _
    $region11: #{decoder_block.7} parent=1 // pred_check_branch
      %16 = sbr.rel (0) target = $region13
    $region12: #{decoder_block.7} parent=1 // pred_region
      _
    $region13: #{decoder_block.7} parent=1 // pred_fallthru
      _
    // Predicated region
    $region14: #{decoder_block.7} parent=1 // pred_check
      _
    $region15: #{decoder_block.7} parent=1 // pred_check_branch
      %18 = sbr.rel (0) target = $region17
    $region16: #{decoder_block.7} parent=1 // pred_region
      _
    $region17: #{decoder_block.7} parent=1 // pred_fallthru
      _
    // Predicated region
    $region18: #{decoder_block.7} parent=1 // pred_check
      _
    $region19: #{decoder_block.7} parent=1 // pred_check_branch
      %20 = sbr.rel (0) target = $region21
    $region20: #{decoder_block.7} parent=1 // pred_region
      _
    $region21: #{decoder_block.7} parent=1 // pred_fallthru
      _
    %p22 = scmp.eq.s32.totalorder 0, 0
    // Predicated region
    $region22: #{decoder_block.7} parent=1 // pred_check
      %p23 = pneg %p22
    $region23: #{decoder_block.7} parent=1 // pred_check_branch
      %25 = sbr.rel (%p23) target = $region25
    $region24: #{decoder_block.7} parent=1 // pred_region
      %v26 = vld [vmem:[%s0] sm:$0xff]
      %v27 = vld [vmem:[%s0 + $0x8] sm:$0xff]
      %v28 = vmul.f32 %v26, %v26
      %v29 = vmul.f32 %v27, %v27
      %vm30 = vcmask 261120
      %v31 = vsel %vm30, %v28, 0.0
      %32 = vadd.xlane.f32.xlu0 %v31
      %v33 = vpop.xlane.xlu0 %32
      %v34 = vsel %vm30, %v29, 0.0
      %35 = vadd.xlane.f32.xlu0 %v34
      %v36 = vpop.xlane.xlu0 %35
      %v37 = vrcp.pop 32.0
      %v38 = vmul.f32 %v33, %v37
      %v39 = vmul.f32 %v36, %v37
      %v40 = vadd.f32 %v38, 1e-06
      %v41 = vadd.f32 %v39, 1e-06
      %v42 = vrsqrt.pop %v40
      %v43 = vrsqrt.pop %v41
      %v44 = vmul.f32 %v26, %v42
      %v45 = vmul.f32 %v27, %v43
      %v46 = vld [vmem:[%s1] sm:$0x1]
      %v48 = vlaneseq
      %v49 = vshrl.u32 %v48, 7
      %v50 = vsub.s32 0, %v49
      %v51 = vrot.slane %v46, %v50
      %v53 = vmul.f32 %v44, %v51
      %v54 = vmul.f32 %v45, %v51
      %v55 = vpack.c.bf16 %v54, %v53
      %v57 = vunpack.c.l.b16 %v55
      %v58 = vunpack.c.h.b16 %v55
      %v59 = vpack.c.b16 %v57, %v57
      %v60 = vpack.c.b16 %v58, %v58
      %vm63 = vcmask 257024
      %64 = vst.msk [vmem:[#allocation2] sm:$0xf] %vm63, %v59
      %65 = vst.msk [vmem:[#allocation2 + $0x4] sm:$0xf] %vm63, %v60
      %66 = vst.msk [vmem:[#allocation3] sm:$0xff] %vm30, %v26
      %67 = vst.msk [vmem:[#allocation3 + $0x8] sm:$0xff] %vm30, %v27
    $region25: #{decoder_block.7} parent=1 // pred_fallthru
      _
    %v68 = vld [vmem:[#allocation2] sm:$0xf]
    %v69 = vld [vmem:[#allocation2 + $0x4] sm:$0xf]
    %v70 = vld [vmem:[%s2] sm:$0xf]
    %v71 = vld [vmem:[%s2 + $0x4] sm:$0xf]
    %v72 = vld [vmem:[%s2 + $0x8] sm:$0xf]
    %v73 = vld [vmem:[%s2 + $0xc] sm:$0xf]
    %v76 = vunpack.c.l.b16 %v68
    %v77 = vunpack.c.l.b16 %v69
    %v78 = vpack.c.b16 %v77, %v76
    %v83 = vunpack.c.l.b16 %v70
    %v84 = vunpack.c.l.b16 %v71
    %v85 = vunpack.c.l.b16 %v72
    %v86 = vunpack.c.l.b16 %v73
    %v87 = vpack.c.b16 %v84, %v83
    %v88 = vpack.c.b16 %v86, %v85
    %vm91 = vcmask 261120
    %v93 = vsel %vm91, %v78, 0
    %95 = vmatprep.subr.bf16.mxu0 0
    %96 = vmatpush1.bf16.msra.mxu0 0
    %97 = vmatprep.subr.bf16.mxu0 0
    %98 = vmatpush1.bf16.msra.mxu0 0
    %99 = vmatprep.subr.bf16.mxu0 0
    %100 = vmatpush1.bf16.msra.mxu0 0
    %101 = vmatprep.subr.bf16.mxu0 0
    %102 = vmatpush1.bf16.msra.mxu0 0
    %103 = vmatprep.subr.bf16.mxu0 0
    %104 = vmatpush1.bf16.msra.mxu0 0
    %105 = vmatprep.subr.bf16.mxu0 0
    %106 = vmatpush1.bf16.msra.mxu0 0
    %107 = vmatprep.subr.bf16.mxu0 0
    %108 = vmatpush1.bf16.msra.mxu0 %v88
    %109 = vmatprep.subr.bf16.mxu0 0
    %110 = vmatpush1.bf16.msra.mxu0 %v87
    %111 = vmatprep.subr.bf16.mxu0 0
    %112 = vmatpush2.bf16.msra.mxu0 0
    %113 = vmatprep.subr.bf16.mxu0 0
    %114 = vmatpush2.bf16.msra.mxu0 0
    %115 = vmatprep.subr.bf16.mxu0 0
    %116 = vmatpush2.bf16.msra.mxu0 0
    %117 = vmatprep.subr.bf16.mxu0 0
    %118 = vmatpush2.bf16.msra.mxu0 0
    %119 = vmatprep.subr.bf16.mxu0 0
    %120 = vmatpush2.bf16.msra.mxu0 0
    %121 = vmatprep.subr.bf16.mxu0 0
    %122 = vmatpush2.bf16.msra.mxu0 0
    %123 = vmatprep.subr.bf16.mxu0 0
    %124 = vmatpush2.bf16.msra.mxu0 0
    %125 = vmatprep.subr.bf16.mxu0 0
    %126 = vmatpush2.bf16.msra.mxu0 0
    %127 = vmatprep.mubr.bf16.mxu0 0
    %128 = vmatmul.mubr.bf16.gmra.mxu0 %v93
    %v129 = vpop.f32.mrf.mxu0
    %v130 = vadd.f32 0.0, %v129
    %v131 = vpop.f32.mrf.mxu0
    %v132 = vpop.f32.mrf.mxu0
    %v133 = vadd.f32 0.0, %v132
    %v134 = vpop.f32.mrf.mxu0
    %135 = vdwg.mxu0
    %v136 = vld [vmem:[%s3] sm:$0xf]
    %v137 = vld [vmem:[%s3 + $0x4] sm:$0xf]
    %v138 = vld [vmem:[%s3 + $0x8] sm:$0xf]
    %v139 = vld [vmem:[%s3 + $0xc] sm:$0xf]
    %v144 = vunpack.c.l.b16 %v136
    %v145 = vunpack.c.l.b16 %v137
    %v146 = vunpack.c.l.b16 %v138
    %v147 = vunpack.c.l.b16 %v139
    %v148 = vpack.c.b16 %v145, %v144
    %v149 = vpack.c.b16 %v147, %v146
    %152 = vmatprep.subr.bf16.mxu0 0
    %153 = vmatpush1.bf16.msra.mxu0 0
    %154 = vmatprep.subr.bf16.mxu0 0
    %155 = vmatpush1.bf16.msra.mxu0 0
    %156 = vmatprep.subr.bf16.mxu0 0
    %157 = vmatpush1.bf16.msra.mxu0 0
    %158 = vmatprep.subr.bf16.mxu0 0
    %159 = vmatpush1.bf16.msra.mxu0 0
    %160 = vmatprep.subr.bf16.mxu0 0
    %161 = vmatpush1.bf16.msra.mxu0 0
    %162 = vmatprep.subr.bf16.mxu0 0
    %163 = vmatpush1.bf16.msra.mxu0 0
    %164 = vmatprep.subr.bf16.mxu0 0
    %165 = vmatpush1.bf16.msra.mxu0 %v149
    %166 = vmatprep.subr.bf16.mxu0 0
    %167 = vmatpush1.bf16.msra.mxu0 %v148
    %168 = vmatprep.subr.bf16.mxu0 0
    %169 = vmatpush2.bf16.msra.mxu0 0
    %170 = vmatprep.subr.bf16.mxu0 0
    %171 = vmatpush2.bf16.msra.mxu0 0
    %172 = vmatprep.subr.bf16.mxu0 0
    %173 = vmatpush2.bf16.msra.mxu0 0
    %174 = vmatprep.subr.bf16.mxu0 0
    %175 = vmatpush2.bf16.msra.mxu0 0
    %176 = vmatprep.subr.bf16.mxu0 0
    %177 = vmatpush2.bf16.msra.mxu0 0
    %178 = vmatprep.subr.bf16.mxu0 0
    %179 = vmatpush2.bf16.msra.mxu0 0
    %180 = vmatprep.subr.bf16.mxu0 0
    %181 = vmatpush2.bf16.msra.mxu0 0
    %182 = vmatprep.subr.bf16.mxu0 0
    %183 = vmatpush2.bf16.msra.mxu0 0
    %184 = vmatprep.mubr.bf16.mxu0 0
    %185 = vmatmul.mubr.bf16.gmra.mxu0 %v93
    %v186 = vpop.f32.mrf.mxu0
    %v187 = vadd.f32 0.0, %v186
    %v188 = vpop.f32.mrf.mxu0
    %v189 = vpop.f32.mrf.mxu0
    %v190 = vadd.f32 0.0, %v189
    %v191 = vpop.f32.mrf.mxu0
    %192 = vdwg.mxu0
    %v193 = vxor.u32 %v187, 2147483648
    %v194 = vxor.u32 %v190, 2147483648
    %v195 = vmul.f32 %v193, 1.442695
    %v196 = vpow.pop %v195
    %v197 = vmul.f32 %v194, 1.442695
    %v198 = vpow.pop %v197
    %v199 = vadd.f32 %v196, 1.0
    %v200 = vadd.f32 %v198, 1.0
    %v201 = vrcp.pop %v199
    %v202 = vmul.f32 1.0, %v201
    %v203 = vrcp.pop %v200
    %v204 = vmul.f32 1.0, %v203
    %v205 = vmul.f32 %v187, %v202
    %v206 = vmul.f32 %v190, %v204
    %v207 = vmul.f32 %v130, %v205
    %v208 = vmul.f32 %v133, %v206
    %v209 = vld [vmem:[#allocation3] sm:$0xff]
    %v210 = vld [vmem:[#allocation3 + $0x8] sm:$0xff]
    %v211 = vpack.c.bf16 %v208, %v207
    %v212 = vld [vmem:[%s4] sm:$0xf]
    %v213 = vld [vmem:[%s4 + $0x4] sm:$0xf]
    %v214 = vld [vmem:[%s4 + $0x8] sm:$0xf]
    %v215 = vld [vmem:[%s4 + $0xc] sm:$0xf]
    %v216 = vld [vmem:[%s4 + $0x10] sm:$0xf]
    %v217 = vld [vmem:[%s4 + $0x14] sm:$0xf]
    %v218 = vld [vmem:[%s4 + $0x18] sm:$0xf]
    %v219 = vld [vmem:[%s4 + $0x1c] sm:$0xf]
    %v228 = vunpack.c.l.b16 %v212
    %v229 = vunpack.c.l.b16 %v213
    %v230 = vunpack.c.l.b16 %v214
    %v231 = vunpack.c.l.b16 %v215
    %v232 = vunpack.c.l.b16 %v216
    %v233 = vunpack.c.l.b16 %v217
    %v234 = vunpack.c.l.b16 %v218
    %v235 = vunpack.c.l.b16 %v219
    %v236 = vpack.c.b16 %v229, %v228
    %v237 = vpack.c.b16 %v231, %v230
    %v238 = vpack.c.b16 %v233, %v232
    %v239 = vpack.c.b16 %v235, %v234
    %vm244 = vcmask 523264
    %v246 = vsel %vm244, %v211, 0
    %248 = vmatprep.subr.bf16.mxu0 0
    %249 = vmatpush1.bf16.msra.mxu0 0
    %250 = vmatprep.subr.bf16.mxu0 0
    %251 = vmatpush1.bf16.msra.mxu0 0
    %252 = vmatprep.subr.bf16.mxu0 0
    %253 = vmatpush1.bf16.msra.mxu0 0
    %254 = vmatprep.subr.bf16.mxu0 0
    %255 = vmatpush1.bf16.msra.mxu0 0
    %256 = vmatprep.subr.bf16.mxu0 0
    %257 = vmatpush1.bf16.msra.mxu0 %v239
    %258 = vmatprep.subr.bf16.mxu0 0
    %259 = vmatpush1.bf16.msra.mxu0 %v238
    %260 = vmatprep.subr.bf16.mxu0 0
    %261 = vmatpush1.bf16.msra.mxu0 %v237
    %262 = vmatprep.subr.bf16.mxu0 0
    %263 = vmatpush1.bf16.msra.mxu0 %v236
    %264 = vmatprep.subr.bf16.mxu0 0
    %265 = vmatpush2.bf16.msra.mxu0 0
    %266 = vmatprep.subr.bf16.mxu0 0
    %267 = vmatpush2.bf16.msra.mxu0 0
    %268 = vmatprep.subr.bf16.mxu0 0
    %269 = vmatpush2.bf16.msra.mxu0 0
    %270 = vmatprep.subr.bf16.mxu0 0
    %271 = vmatpush2.bf16.msra.mxu0 0
    %272 = vmatprep.subr.bf16.mxu0 0
    %273 = vmatpush2.bf16.msra.mxu0 0
    %274 = vmatprep.subr.bf16.mxu0 0
    %275 = vmatpush2.bf16.msra.mxu0 0
    %276 = vmatprep.subr.bf16.mxu0 0
    %277 = vmatpush2.bf16.msra.mxu0 0
    %278 = vmatprep.subr.bf16.mxu0 0
    %279 = vmatpush2.bf16.msra.mxu0 0
    %280 = vmatprep.mubr.bf16.mxu0 0
    %281 = vmatmul.mubr.bf16.gmra.mxu0 %v246
    %v282 = vpop.f32.mrf.mxu0
    %v283 = vadd.f32 0.0, %v282
    %v284 = vpop.f32.mrf.mxu0
    %v285 = vpop.f32.mrf.mxu0
    %v286 = vadd.f32 0.0, %v285
    %v287 = vpop.f32.mrf.mxu0
    %288 = vdwg.mxu0
    %v289 = vadd.f32 %v209, %v283
    %v290 = vadd.f32 %v210, %v286
    %291 = vst.msk [vmem:[#allocation3] sm:$0xff] %vm91, %v289
    %292 = vst.msk [vmem:[#allocation3 + $0x8] sm:$0xff] %vm91, %v290
    // Predicated region
    $region26: #{decoder_block.7} parent=1 // pred_check
      _
    $region27: #{decoder_block.7} parent=1 // pred_check_branch
      %294 = sbr.rel (0) target = $region29
    $region28: #{decoder_block.7} parent=1 // pred_region
      %s296 = ssub.s32 256, 256
      %297 = vsyncadd [#allocation4], %s296
      %s298 = sshll.u32 [#allocation3], 4
      %s299 = int_to_ptr.vmem [resolvable:$true] %s298
      %304 = dma.vmem_to_hbm [thread:$0]  %s299, 256, %s5, [#allocation4], 128, 128, 8
    $region29: #{decoder_block.7} parent=1 // pred_fallthru
      _
    // Predicated region
    $region30: #{decoder_block.7} parent=1 // pred_check
      _
    $region31: #{decoder_block.7} parent=1 // pred_check_branch
      %306 = sbr.rel (0) target = $region33
    $region32: #{decoder_block.7} parent=1 // pred_region
      %307 = dma.done [#allocation4], 256
    $region33: #{decoder_block.7} parent=1 // pred_fallthru
      _
    %308 = vsyncpa [#allocation4], 1

</llo_original>
